<compile_context>
chip_gen: v6e
topology: v6e:2x2x1
jax: 0.10.0
libtpu: 0.0.40
codegen_flags: <defaults>
</compile_context>

<pallas_src>
import functools

import numpy as np
import jax
import jax.numpy as jnp
from jax.experimental import pallas as pl
from jax.experimental.pallas import tpu as pltpu

# ---------------- config (small, consistent with the module) ----------------
B = 2            # batch
T = 8            # sequence length
N_HEAD = 4
HEAD_DIM = 8
C = N_HEAD * HEAD_DIM    # n_embd = 32
ROPE_THETA = 10000.0
NEG_MASK = -1e30         # finite "masked" value; exp underflows to exactly 0


# ------------------------------- Pallas kernel -------------------------------
def attn_kernel(x_ref, wqkv_ref, bqkv_ref, cos_ref, sin_ref, wproj_ref, bproj_ref,
                o_ref, y_acc, *, n_head, head_dim):
    t = x_ref.shape[1]
    c = n_head * head_dim
    d = head_dim
    d2 = d // 2
    mxu_dtype = wqkv_ref.dtype            # f32 for the tight check, bf16 for production

    # ---- fused QKV projection: a single lane-dense matmul (3C output columns) ----
    x = x_ref[0]                                                        # (T, C) f32
    qkv = jnp.dot(x.astype(mxu_dtype), wqkv_ref[...],
                  preferred_element_type=jnp.float32) + bqkv_ref[...]   # (T, 3C) f32

    # ---- RoPE tables: full head width, sign pattern folded into sin ----
    cos = cos_ref[...]            # (T, D)  = [cos | cos]
    sin_s = sin_ref[...]          # (T, D)  = [-sin | sin]

    def rope(u):                  # u: (T, D), one head in rotate-half layout [re | im]
        if d % 128 == 0:
            # vreg-aligned head_dim: lane rotate on the XLU slot (free under MXU/VPU load)
            u_sw = pltpu.roll(u, d2, axis=-1)
        else:
            # sub-vreg toy head_dim: static half-slice concat lowers robustly, same cost
            u_sw = jnp.concatenate([u[:, d2:], u[:, :d2]], axis=-1)
        return u * cos + u_sw * sin_s

    # ---- causal mask generated in-kernel (no precomputed (R,R) bias DMA) ----
    row = jax.lax.broadcasted_iota(jnp.int32, (t, t), 0)
    col = jax.lax.broadcasted_iota(jnp.int32, (t, t), 1)
    causal = col <= row

    # ---- per-head attention; heads are static lane-offset slices of qkv ----
    for h in range(n_head):                 # unrolled at trace time (H is tiny)
        q = rope(qkv[:, 0 * c + h * d:0 * c + (h + 1) * d])   # pre-scaled by 1/sqrt(D)
        k = rope(qkv[:, 1 * c + h * d:1 * c + (h + 1) * d])
        v = qkv[:, 2 * c + h * d:2 * c + (h + 1) * d]

        s = jnp.einsum('qd,kd->qk', q.astype(mxu_dtype), k.astype(mxu_dtype),
                       preferred_element_type=jnp.float32)      # (T, T) f32
        s = jnp.where(causal, s, jnp.float32(NEG_MASK))
        m = jnp.max(s, axis=-1, keepdims=True)
        p = jnp.exp(s - m)                                      # unnormalized, f32
        l = jnp.sum(p, axis=-1, keepdims=True)
        y = jnp.einsum('qk,kd->qd', p.astype(mxu_dtype), v.astype(mxu_dtype),
                       preferred_element_type=jnp.float32)      # (T, D) f32
        # Normalize AFTER the PV matmul: T*D work instead of T*T.  approx=True would move
        # the reciprocal to the EUP slot (v5e) once a ~1e-3 tolerance is acceptable.
        y = y * pl.reciprocal(l, approx=False)
        y_acc[:, h * d:(h + 1) * d] = y      # concat-free head packing at lane offsets

    # ---- output projection: head reduction rides the MXU contraction ----
    o = jnp.dot(y_acc[...].astype(mxu_dtype), wproj_ref[...],
                preferred_element_type=jnp.float32) + bproj_ref[...]    # (T, C) f32
    o_ref[0] = o


# --------------------------- host-side param prep ----------------------------
def prepare_attention_params(wqkv, bqkv, wproj, bproj, freqs_cos, freqs_sin,
                             n_head, head_dim, mxu_dtype=jnp.float32):
    """One-time (init-time) repacking of weights/tables into kernel layout.

    * Q/K columns of the fused QKV weight are permuted per head into rotate-half order
      ([reals | imags]) so RoPE is elementwise math + a half swap in the kernel.
    * The 1/sqrt(head_dim) softmax scale is folded into the Q columns/bias.
    * cos is tiled to full head width; sin gets the rotate-half sign pattern [-sin | sin].
    * Matmul weights are stored in the MXU operand dtype (bf16 for production);
      biases and RoPE tables stay f32 (the whole softmax path stays f32).
    """
    c = n_head * head_dim
    d = head_dim
    scale = 1.0 / np.sqrt(d)

    wqkv = np.asarray(wqkv, np.float32)                  # (C, 3C), y = x @ W
    bqkv = np.asarray(bqkv, np.float32).reshape(3 * c)   # (3C,)
    wproj = np.asarray(wproj, np.float32)                # (C, C)
    bproj = np.asarray(bproj, np.float32).reshape(1, c)  # (1, C)
    cos = np.asarray(freqs_cos, np.float32)              # (T, D/2)
    sin = np.asarray(freqs_sin, np.float32)

    # Rotate-half order within a head: [even (real) channels | odd (imag) channels].
    rh = np.concatenate([np.arange(0, d, 2), np.arange(1, d, 2)])

    w = wqkv.copy()
    bq = bqkv.copy()
    for h in range(n_head):
        q_dst = 0 * c + h * d + np.arange(d)
        k_dst = 1 * c + h * d + np.arange(d)
        w[:, q_dst] = wqkv[:, 0 * c + h * d + rh] * scale     # fold 1/sqrt(D) into Q
        w[:, k_dst] = wqkv[:, 1 * c + h * d + rh]
        bq[q_dst] = bqkv[0 * c + h * d + rh] * scale
        bq[k_dst] = bqkv[1 * c + h * d + rh]
    # V columns and the c_proj weight keep the original channel order.

    cos_d = np.concatenate([cos, cos], axis=-1)          # (T, D)
    sin_s = np.concatenate([-sin, sin], axis=-1)         # (T, D)

    return (jnp.asarray(w, mxu_dtype),
            jnp.asarray(bq.reshape(1, 3 * c), jnp.float32),
            jnp.asarray(cos_d, jnp.float32),
            jnp.asarray(sin_s, jnp.float32),
            jnp.asarray(wproj, mxu_dtype),
            jnp.asarray(bproj, jnp.float32))


# --------------------------------- wrapper -----------------------------------
def causal_self_attention(x, params, *, n_head, head_dim):
    wqkv, bqkv, cos_d, sin_s, wproj, bproj = params
    b, t, c = x.shape
    kernel = functools.partial(attn_kernel, n_head=n_head, head_dim=head_dim)
    return pl.pallas_call(
        kernel,
        out_shape=jax.ShapeDtypeStruct((b, t, c), jnp.float32),
        grid_spec=pltpu.PrefetchScalarGridSpec(
            num_scalar_prefetch=0,
            grid=(b,),                                           # batch on the grid
            in_specs=[
                pl.BlockSpec((1, t, c), lambda i: (i, 0, 0)),    # x: per-batch block
                pl.BlockSpec(wqkv.shape, lambda i: (0, 0)),      # constants: block index
                pl.BlockSpec(bqkv.shape, lambda i: (0, 0)),      #   never changes ->
                pl.BlockSpec(cos_d.shape, lambda i: (0, 0)),     #   fetched once
                pl.BlockSpec(sin_s.shape, lambda i: (0, 0)),
                pl.BlockSpec(wproj.shape, lambda i: (0, 0)),
                pl.BlockSpec(bproj.shape, lambda i: (0, 0)),
            ],
            out_specs=pl.BlockSpec((1, t, c), lambda i: (i, 0, 0)),
            scratch_shapes=[pltpu.VMEM((t, c), jnp.float32)],    # per-head PV packing slab
        ),
        # "parallel" batch axis -> megacore sharding on v7x (2 TensorCores).
        compiler_params=pltpu.CompilerParams(dimension_semantics=("parallel",)),
    )(x, wqkv, bqkv, cos_d, sin_s, wproj, bproj)


# --------------------------- pure-JAX reference ------------------------------
def ref_forward(x, wqkv, bqkv, wproj, bproj, freqs_cos, freqs_sin):
    hp = jax.lax.Precision.HIGHEST
    b, t, c = x.shape
    qkv = jnp.einsum('btc,cn->btn', x, wqkv, precision=hp) + bqkv
    q, k, v = jnp.split(qkv, 3, axis=2)
    q = q.reshape(b, t, N_HEAD, HEAD_DIM)
    k = k.reshape(b, t, N_HEAD, HEAD_DIM)
    v = v.reshape(b, t, N_HEAD, HEAD_DIM)

    def rope(u):
        ur = u.reshape(b, t, N_HEAD, HEAD_DIM // 2, 2)
        a, bb = ur[..., 0], ur[..., 1]
        cos = freqs_cos[None, :, None, :]
        sin = freqs_sin[None, :, None, :]
        out_r = a * cos - bb * sin
        out_i = a * sin + bb * cos
        return jnp.stack([out_r, out_i], axis=-1).reshape(b, t, N_HEAD, HEAD_DIM)

    q = rope(q)
    k = rope(k)
    q = q.transpose(0, 2, 1, 3)
    k = k.transpose(0, 2, 1, 3)
    v = v.transpose(0, 2, 1, 3)
    s = jnp.einsum('bhtd,bhsd->bhts', q, k, precision=hp) / jnp.sqrt(jnp.float32(HEAD_DIM))
    mask = jnp.tril(jnp.ones((t, t), dtype=bool))
    s = jnp.where(mask, s, -jnp.inf)
    p = jax.nn.softmax(s, axis=-1)
    y = jnp.einsum('bhts,bhsd->bhtd', p, v, precision=hp)
    y = y.transpose(0, 2, 1, 3).reshape(b, t, c)
    return jnp.einsum('btc,cd->btd', y, wproj, precision=hp) + bproj


# ----------------------------------- main ------------------------------------
if __name__ == "__main__":
    key = jax.random.PRNGKey(0)
    kx, k1, k2, k3, k4 = jax.random.split(key, 5)

    # Deterministic parameter init (torch Linear-like uniform bounds).
    bound = 1.0 / np.sqrt(C)
    wqkv = jax.random.uniform(k1, (C, 3 * C), jnp.float32, -bound, bound)
    bqkv = jax.random.uniform(k2, (1, 3 * C), jnp.float32, -bound, bound)
    wproj = jax.random.uniform(k3, (C, C), jnp.float32, -bound, bound)
    bproj = jax.random.uniform(k4, (1, C), jnp.float32, -bound, bound)
    x = jax.random.normal(kx, (B, T, C), jnp.float32)

    # RoPE tables (freqs_cis split into cos/sin), as in the PyTorch module.
    inv_freq = 1.0 / (ROPE_THETA ** (np.arange(0, HEAD_DIM, 2, dtype=np.float32) / HEAD_DIM))
    angles = np.outer(np.arange(T, dtype=np.float32), inv_freq)   # (T, HEAD_DIM//2)
    freqs_cos = jnp.asarray(np.cos(angles), jnp.float32)
    freqs_sin = jnp.asarray(np.sin(angles), jnp.float32)

    ref = jax.block_until_ready(
        ref_forward(x, wqkv, bqkv, wproj, bproj, freqs_cos, freqs_sin))

    # f32 MXU operands: tight correctness check against the reference.
    params_f32 = prepare_attention_params(wqkv, bqkv, wproj, bproj, freqs_cos, freqs_sin,
                                          N_HEAD, HEAD_DIM, mxu_dtype=jnp.float32)
    out_f32 = jax.block_until_ready(
        causal_self_attention(x, params_f32, n_head=N_HEAD, head_dim=HEAD_DIM))
    np.testing.assert_allclose(np.asarray(out_f32), np.asarray(ref), rtol=1e-3, atol=1e-3)

    # bf16 MXU operands with f32 accumulation + f32 softmax math: the production dtype
    # recommended for v5e/v6e/v7x; checked at a bf16-appropriate tolerance.
    params_bf16 = prepare_attention_params(wqkv, bqkv, wproj, bproj, freqs_cos, freqs_sin,
                                           N_HEAD, HEAD_DIM, mxu_dtype=jnp.bfloat16)
    out_bf16 = jax.block_until_ready(
        causal_self_attention(x, params_bf16, n_head=N_HEAD, head_dim=HEAD_DIM))
    np.testing.assert_allclose(np.asarray(out_bf16), np.asarray(ref), rtol=5e-2, atol=5e-2)

    print("KERNEL_OK")
</pallas_src>

<mosaic_0001>
module attributes {stable_mosaic.version = 11 : i64} {
  func.func @attn_kernel(%arg0: i32, %arg1: memref<1x8x32xf32, #tpu.memory_space<vmem>>, %arg2: memref<32x96xf32, #tpu.memory_space<vmem>>, %arg3: memref<1x96xf32, #tpu.memory_space<vmem>>, %arg4: memref<8x8xf32, #tpu.memory_space<vmem>>, %arg5: memref<8x8xf32, #tpu.memory_space<vmem>>, %arg6: memref<32x32xf32, #tpu.memory_space<vmem>>, %arg7: memref<1x32xf32, #tpu.memory_space<vmem>>, %arg8: memref<1x8x32xf32, #tpu.memory_space<vmem>>, %arg9: memref<8x32xf32, #tpu.memory_space<vmem>>) attributes {dimension_semantics = [#tpu.dimension_semantics<parallel>], iteration_bounds = array<i64: 2>, scalar_prefetch = 0 : i64, scratch_operands = 1 : i64, tpu.core_type = #tpu.core_type<tc>, window_params = [{transform_indices = @transform_0, window_bounds = array<i64: 1, 8, 32>}, {pipeline_mode = #tpu.pipeline_mode<synchronous>, transform_indices = @transform_1, window_bounds = array<i64: 32, 96>}, {pipeline_mode = #tpu.pipeline_mode<synchronous>, transform_indices = @transform_2, window_bounds = array<i64: 1, 96>}, {pipeline_mode = #tpu.pipeline_mode<synchronous>, transform_indices = @transform_3, window_bounds = array<i64: 8, 8>}, {pipeline_mode = #tpu.pipeline_mode<synchronous>, transform_indices = @transform_4, window_bounds = array<i64: 8, 8>}, {pipeline_mode = #tpu.pipeline_mode<synchronous>, transform_indices = @transform_5, window_bounds = array<i64: 32, 32>}, {pipeline_mode = #tpu.pipeline_mode<synchronous>, transform_indices = @transform_6, window_bounds = array<i64: 1, 32>}, {transform_indices = @transform_7, window_bounds = array<i64: 1, 8, 32>}]} {
    %c0 = arith.constant 0 : index
    %c0_0 = arith.constant 0 : index
    %c0_1 = arith.constant 0 : index
    %0 = vector.load %arg1[%c0, %c0_0, %c0_1] : memref<1x8x32xf32, #tpu.memory_space<vmem>>, vector<1x8x32xf32>
    %1 = vector.shape_cast %0 : vector<1x8x32xf32> to vector<8x32xf32>
    %c0_2 = arith.constant 0 : index
    %c0_3 = arith.constant 0 : index
    %2 = vector.load %arg2[%c0_2, %c0_3] : memref<32x96xf32, #tpu.memory_space<vmem>>, vector<32x96xf32>
    %cst = arith.constant dense<0.000000e+00> : vector<8x96xf32>
    %3 = tpu.matmul %1, %2, %cst {dimension_numbers = #tpu.dot_dimension_numbers<[1], [0], [0], [1], [0, 0, 1, 1], [], []>} : vector<8x32xf32>, vector<32x96xf32>, vector<8x96xf32> -> vector<8x96xf32>
    %c0_4 = arith.constant 0 : index
    %c0_5 = arith.constant 0 : index
    %4 = vector.load %arg3[%c0_4, %c0_5] : memref<1x96xf32, #tpu.memory_space<vmem>>, vector<1x96xf32>
    %5 = vector.broadcast %4 : vector<1x96xf32> to vector<8x96xf32>
    %6 = arith.addf %3, %5 : vector<8x96xf32>
    %c0_6 = arith.constant 0 : index
    %c0_7 = arith.constant 0 : index
    %7 = vector.load %arg4[%c0_6, %c0_7] : memref<8x8xf32, #tpu.memory_space<vmem>>, vector<8x8xf32>
    %c0_8 = arith.constant 0 : index
    %c0_9 = arith.constant 0 : index
    %8 = vector.load %arg5[%c0_8, %c0_9] : memref<8x8xf32, #tpu.memory_space<vmem>>, vector<8x8xf32>
    %9 = tpu.iota {dimensions = array<i32: 0>} : vector<8x8xi32>
    %10 = tpu.iota {dimensions = array<i32: 1>} : vector<8x8xi32>
    %11 = arith.cmpi sle, %10, %9 : vector<8x8xi32>
    %12 = vector.extract_strided_slice %6 {offsets = [0, 0], sizes = [8, 8], strides = [1, 1]} : vector<8x96xf32> to vector<8x8xf32>
    %13 = vector.extract_strided_slice %12 {offsets = [0, 4], sizes = [8, 4], strides = [1, 1]} : vector<8x8xf32> to vector<8x4xf32>
    %14 = vector.extract_strided_slice %12 {offsets = [0, 0], sizes = [8, 4], strides = [1, 1]} : vector<8x8xf32> to vector<8x4xf32>
    %15 = tpu.concatenate %13, %14 in 1 : vector<8x4xf32>, vector<8x4xf32> -> vector<8x8xf32>
    %16 = arith.mulf %12, %7 : vector<8x8xf32>
    %17 = arith.mulf %15, %8 : vector<8x8xf32>
    %18 = arith.addf %16, %17 : vector<8x8xf32>
    %19 = vector.extract_strided_slice %6 {offsets = [0, 32], sizes = [8, 8], strides = [1, 1]} : vector<8x96xf32> to vector<8x8xf32>
    %20 = vector.extract_strided_slice %19 {offsets = [0, 4], sizes = [8, 4], strides = [1, 1]} : vector<8x8xf32> to vector<8x4xf32>
    %21 = vector.extract_strided_slice %19 {offsets = [0, 0], sizes = [8, 4], strides = [1, 1]} : vector<8x8xf32> to vector<8x4xf32>
    %22 = tpu.concatenate %20, %21 in 1 : vector<8x4xf32>, vector<8x4xf32> -> vector<8x8xf32>
    %23 = arith.mulf %19, %7 : vector<8x8xf32>
    %24 = arith.mulf %22, %8 : vector<8x8xf32>
    %25 = arith.addf %23, %24 : vector<8x8xf32>
    %26 = vector.extract_strided_slice %6 {offsets = [0, 64], sizes = [8, 8], strides = [1, 1]} : vector<8x96xf32> to vector<8x8xf32>
    "tpu.trace_start"() <{level = 10 : i32, message = "qd,kd->qk"}> : () -> ()
    %cst_10 = arith.constant dense<0.000000e+00> : vector<8x8xf32>
    %27 = tpu.matmul %18, %25, %cst_10 {dimension_numbers = #tpu.dot_dimension_numbers<[1], [1], [0], [0], [0, 0, 1, 0], [], []>} : vector<8x8xf32>, vector<8x8xf32>, vector<8x8xf32> -> vector<8x8xf32>
    %cst_11 = arith.constant -1.000000e+30 : f32
    "tpu.trace_stop"() : () -> ()
    %28 = vector.broadcast %cst_11 : f32 to vector<8x8xf32>
    %29 = arith.select %11, %27, %28 : vector<8x8xi1>, vector<8x8xf32>
    %cst_12 = arith.constant dense<0xFF800000> : vector<8xf32>
    %30 = vector.multi_reduction <maximumf>, %29, %cst_12 [1] : vector<8x8xf32> to vector<8xf32>
    %31 = vector.shape_cast %30 : vector<8xf32> to vector<8x1xf32>
    %32 = vector.broadcast %31 : vector<8x1xf32> to vector<8x8xf32>
    %33 = arith.subf %29, %32 : vector<8x8xf32>
    %34 = math.exp %33 : vector<8x8xf32>
    %cst_13 = arith.constant dense<0.000000e+00> : vector<8xf32>
    %35 = vector.multi_reduction <add>, %34, %cst_13 [1] : vector<8x8xf32> to vector<8xf32>
    %36 = vector.shape_cast %35 : vector<8xf32> to vector<8x1xf32>
    "tpu.trace_start"() <{level = 10 : i32, message = "qk,kd->qd"}> : () -> ()
    %cst_14 = arith.constant dense<0.000000e+00> : vector<8x8xf32>
    %37 = tpu.matmul %34, %26, %cst_14 {dimension_numbers = #tpu.dot_dimension_numbers<[1], [0], [0], [1], [0, 0, 1, 1], [], []>} : vector<8x8xf32>, vector<8x8xf32>, vector<8x8xf32> -> vector<8x8xf32>
    "tpu.trace_stop"() : () -> ()
    %38 = tpu.reciprocal %36 : vector<8x1xf32> -> vector<8x1xf32>
    %39 = vector.broadcast %38 : vector<8x1xf32> to vector<8x8xf32>
    %40 = arith.mulf %37, %39 : vector<8x8xf32>
    %c0_15 = arith.constant 0 : index
    %c0_16 = arith.constant 0 : index
    %41 = vector.load %arg9[%c0_15, %c0_16] : memref<8x32xf32, #tpu.memory_space<vmem>>, vector<8x8xf32>
    tpu.vector_store %arg9[%c0_15, %c0_16], %40 {strides = array<i32>} : memref<8x32xf32, #tpu.memory_space<vmem>>, vector<8x8xf32>,
    %42 = vector.extract_strided_slice %6 {offsets = [0, 8], sizes = [8, 8], strides = [1, 1]} : vector<8x96xf32> to vector<8x8xf32>
    %43 = vector.extract_strided_slice %42 {offsets = [0, 4], sizes = [8, 4], strides = [1, 1]} : vector<8x8xf32> to vector<8x4xf32>
    %44 = vector.extract_strided_slice %42 {offsets = [0, 0], sizes = [8, 4], strides = [1, 1]} : vector<8x8xf32> to vector<8x4xf32>
    %45 = tpu.concatenate %43, %44 in 1 : vector<8x4xf32>, vector<8x4xf32> -> vector<8x8xf32>
    %46 = arith.mulf %42, %7 : vector<8x8xf32>
    %47 = arith.mulf %45, %8 : vector<8x8xf32>
    %48 = arith.addf %46, %47 : vector<8x8xf32>
    %49 = vector.extract_strided_slice %6 {offsets = [0, 40], sizes = [8, 8], strides = [1, 1]} : vector<8x96xf32> to vector<8x8xf32>
    %50 = vector.extract_strided_slice %49 {offsets = [0, 4], sizes = [8, 4], strides = [1, 1]} : vector<8x8xf32> to vector<8x4xf32>
    %51 = vector.extract_strided_slice %49 {offsets = [0, 0], sizes = [8, 4], strides = [1, 1]} : vector<8x8xf32> to vector<8x4xf32>
    %52 = tpu.concatenate %50, %51 in 1 : vector<8x4xf32>, vector<8x4xf32> -> vector<8x8xf32>
    %53 = arith.mulf %49, %7 : vector<8x8xf32>
    %54 = arith.mulf %52, %8 : vector<8x8xf32>
    %55 = arith.addf %53, %54 : vector<8x8xf32>
    %56 = vector.extract_strided_slice %6 {offsets = [0, 72], sizes = [8, 8], strides = [1, 1]} : vector<8x96xf32> to vector<8x8xf32>
    "tpu.trace_start"() <{level = 10 : i32, message = "qd,kd->qk"}> : () -> ()
    %cst_17 = arith.constant dense<0.000000e+00> : vector<8x8xf32>
    %57 = tpu.matmul %48, %55, %cst_17 {dimension_numbers = #tpu.dot_dimension_numbers<[1], [1], [0], [0], [0, 0, 1, 0], [], []>} : vector<8x8xf32>, vector<8x8xf32>, vector<8x8xf32> -> vector<8x8xf32>
    %cst_18 = arith.constant -1.000000e+30 : f32
    "tpu.trace_stop"() : () -> ()
    %58 = vector.broadcast %cst_18 : f32 to vector<8x8xf32>
    %59 = arith.select %11, %57, %58 : vector<8x8xi1>, vector<8x8xf32>
    %cst_19 = arith.constant dense<0xFF800000> : vector<8xf32>
    %60 = vector.multi_reduction <maximumf>, %59, %cst_19 [1] : vector<8x8xf32> to vector<8xf32>
    %61 = vector.shape_cast %60 : vector<8xf32> to vector<8x1xf32>
    %62 = vector.broadcast %61 : vector<8x1xf32> to vector<8x8xf32>
    %63 = arith.subf %59, %62 : vector<8x8xf32>
    %64 = math.exp %63 : vector<8x8xf32>
    %cst_20 = arith.constant dense<0.000000e+00> : vector<8xf32>
    %65 = vector.multi_reduction <add>, %64, %cst_20 [1] : vector<8x8xf32> to vector<8xf32>
    %66 = vector.shape_cast %65 : vector<8xf32> to vector<8x1xf32>
    "tpu.trace_start"() <{level = 10 : i32, message = "qk,kd->qd"}> : () -> ()
    %cst_21 = arith.constant dense<0.000000e+00> : vector<8x8xf32>
    %67 = tpu.matmul %64, %56, %cst_21 {dimension_numbers = #tpu.dot_dimension_numbers<[1], [0], [0], [1], [0, 0, 1, 1], [], []>} : vector<8x8xf32>, vector<8x8xf32>, vector<8x8xf32> -> vector<8x8xf32>
    "tpu.trace_stop"() : () -> ()
    %68 = tpu.reciprocal %66 : vector<8x1xf32> -> vector<8x1xf32>
    %69 = vector.broadcast %68 : vector<8x1xf32> to vector<8x8xf32>
    %70 = arith.mulf %67, %69 : vector<8x8xf32>
    %c0_22 = arith.constant 0 : index
    %c8 = arith.constant 8 : index
    %71 = vector.load %arg9[%c0_22, %c8] : memref<8x32xf32, #tpu.memory_space<vmem>>, vector<8x8xf32>
    tpu.vector_store %arg9[%c0_22, %c8], %70 {strides = array<i32>} : memref<8x32xf32, #tpu.memory_space<vmem>>, vector<8x8xf32>,
    %72 = vector.extract_strided_slice %6 {offsets = [0, 16], sizes = [8, 8], strides = [1, 1]} : vector<8x96xf32> to vector<8x8xf32>
    %73 = vector.extract_strided_slice %72 {offsets = [0, 4], sizes = [8, 4], strides = [1, 1]} : vector<8x8xf32> to vector<8x4xf32>
    %74 = vector.extract_strided_slice %72 {offsets = [0, 0], sizes = [8, 4], strides = [1, 1]} : vector<8x8xf32> to vector<8x4xf32>
    %75 = tpu.concatenate %73, %74 in 1 : vector<8x4xf32>, vector<8x4xf32> -> vector<8x8xf32>
    %76 = arith.mulf %72, %7 : vector<8x8xf32>
    %77 = arith.mulf %75, %8 : vector<8x8xf32>
    %78 = arith.addf %76, %77 : vector<8x8xf32>
    %79 = vector.extract_strided_slice %6 {offsets = [0, 48], sizes = [8, 8], strides = [1, 1]} : vector<8x96xf32> to vector<8x8xf32>
    %80 = vector.extract_strided_slice %79 {offsets = [0, 4], sizes = [8, 4], strides = [1, 1]} : vector<8x8xf32> to vector<8x4xf32>
    %81 = vector.extract_strided_slice %79 {offsets = [0, 0], sizes = [8, 4], strides = [1, 1]} : vector<8x8xf32> to vector<8x4xf32>
    %82 = tpu.concatenate %80, %81 in 1 : vector<8x4xf32>, vector<8x4xf32> -> vector<8x8xf32>
    %83 = arith.mulf %79, %7 : vector<8x8xf32>
    %84 = arith.mulf %82, %8 : vector<8x8xf32>
    %85 = arith.addf %83, %84 : vector<8x8xf32>
    %86 = vector.extract_strided_slice %6 {offsets = [0, 80], sizes = [8, 8], strides = [1, 1]} : vector<8x96xf32> to vector<8x8xf32>
    "tpu.trace_start"() <{level = 10 : i32, message = "qd,kd->qk"}> : () -> ()
    %cst_23 = arith.constant dense<0.000000e+00> : vector<8x8xf32>
    %87 = tpu.matmul %78, %85, %cst_23 {dimension_numbers = #tpu.dot_dimension_numbers<[1], [1], [0], [0], [0, 0, 1, 0], [], []>} : vector<8x8xf32>, vector<8x8xf32>, vector<8x8xf32> -> vector<8x8xf32>
    %cst_24 = arith.constant -1.000000e+30 : f32
    "tpu.trace_stop"() : () -> ()
    %88 = vector.broadcast %cst_24 : f32 to vector<8x8xf32>
    %89 = arith.select %11, %87, %88 : vector<8x8xi1>, vector<8x8xf32>
    %cst_25 = arith.constant dense<0xFF800000> : vector<8xf32>
    %90 = vector.multi_reduction <maximumf>, %89, %cst_25 [1] : vector<8x8xf32> to vector<8xf32>
    %91 = vector.shape_cast %90 : vector<8xf32> to vector<8x1xf32>
    %92 = vector.broadcast %91 : vector<8x1xf32> to vector<8x8xf32>
    %93 = arith.subf %89, %92 : vector<8x8xf32>
    %94 = math.exp %93 : vector<8x8xf32>
    %cst_26 = arith.constant dense<0.000000e+00> : vector<8xf32>
    %95 = vector.multi_reduction <add>, %94, %cst_26 [1] : vector<8x8xf32> to vector<8xf32>
    %96 = vector.shape_cast %95 : vector<8xf32> to vector<8x1xf32>
    "tpu.trace_start"() <{level = 10 : i32, message = "qk,kd->qd"}> : () -> ()
    %cst_27 = arith.constant dense<0.000000e+00> : vector<8x8xf32>
    %97 = tpu.matmul %94, %86, %cst_27 {dimension_numbers = #tpu.dot_dimension_numbers<[1], [0], [0], [1], [0, 0, 1, 1], [], []>} : vector<8x8xf32>, vector<8x8xf32>, vector<8x8xf32> -> vector<8x8xf32>
    "tpu.trace_stop"() : () -> ()
    %98 = tpu.reciprocal %96 : vector<8x1xf32> -> vector<8x1xf32>
    %99 = vector.broadcast %98 : vector<8x1xf32> to vector<8x8xf32>
    %100 = arith.mulf %97, %99 : vector<8x8xf32>
    %c0_28 = arith.constant 0 : index
    %c16 = arith.constant 16 : index
    %101 = vector.load %arg9[%c0_28, %c16] : memref<8x32xf32, #tpu.memory_space<vmem>>, vector<8x8xf32>
    tpu.vector_store %arg9[%c0_28, %c16], %100 {strides = array<i32>} : memref<8x32xf32, #tpu.memory_space<vmem>>, vector<8x8xf32>,
    %102 = vector.extract_strided_slice %6 {offsets = [0, 24], sizes = [8, 8], strides = [1, 1]} : vector<8x96xf32> to vector<8x8xf32>
    %103 = vector.extract_strided_slice %102 {offsets = [0, 4], sizes = [8, 4], strides = [1, 1]} : vector<8x8xf32> to vector<8x4xf32>
    %104 = vector.extract_strided_slice %102 {offsets = [0, 0], sizes = [8, 4], strides = [1, 1]} : vector<8x8xf32> to vector<8x4xf32>
    %105 = tpu.concatenate %103, %104 in 1 : vector<8x4xf32>, vector<8x4xf32> -> vector<8x8xf32>
    %106 = arith.mulf %102, %7 : vector<8x8xf32>
    %107 = arith.mulf %105, %8 : vector<8x8xf32>
    %108 = arith.addf %106, %107 : vector<8x8xf32>
    %109 = vector.extract_strided_slice %6 {offsets = [0, 56], sizes = [8, 8], strides = [1, 1]} : vector<8x96xf32> to vector<8x8xf32>
    %110 = vector.extract_strided_slice %109 {offsets = [0, 4], sizes = [8, 4], strides = [1, 1]} : vector<8x8xf32> to vector<8x4xf32>
    %111 = vector.extract_strided_slice %109 {offsets = [0, 0], sizes = [8, 4], strides = [1, 1]} : vector<8x8xf32> to vector<8x4xf32>
    %112 = tpu.concatenate %110, %111 in 1 : vector<8x4xf32>, vector<8x4xf32> -> vector<8x8xf32>
    %113 = arith.mulf %109, %7 : vector<8x8xf32>
    %114 = arith.mulf %112, %8 : vector<8x8xf32>
    %115 = arith.addf %113, %114 : vector<8x8xf32>
    %116 = vector.extract_strided_slice %6 {offsets = [0, 88], sizes = [8, 8], strides = [1, 1]} : vector<8x96xf32> to vector<8x8xf32>
    "tpu.trace_start"() <{level = 10 : i32, message = "qd,kd->qk"}> : () -> ()
    %cst_29 = arith.constant dense<0.000000e+00> : vector<8x8xf32>
    %117 = tpu.matmul %108, %115, %cst_29 {dimension_numbers = #tpu.dot_dimension_numbers<[1], [1], [0], [0], [0, 0, 1, 0], [], []>} : vector<8x8xf32>, vector<8x8xf32>, vector<8x8xf32> -> vector<8x8xf32>
    %cst_30 = arith.constant -1.000000e+30 : f32
    "tpu.trace_stop"() : () -> ()
    %118 = vector.broadcast %cst_30 : f32 to vector<8x8xf32>
    %119 = arith.select %11, %117, %118 : vector<8x8xi1>, vector<8x8xf32>
    %cst_31 = arith.constant dense<0xFF800000> : vector<8xf32>
    %120 = vector.multi_reduction <maximumf>, %119, %cst_31 [1] : vector<8x8xf32> to vector<8xf32>
    %121 = vector.shape_cast %120 : vector<8xf32> to vector<8x1xf32>
    %122 = vector.broadcast %121 : vector<8x1xf32> to vector<8x8xf32>
    %123 = arith.subf %119, %122 : vector<8x8xf32>
    %124 = math.exp %123 : vector<8x8xf32>
    %cst_32 = arith.constant dense<0.000000e+00> : vector<8xf32>
    %125 = vector.multi_reduction <add>, %124, %cst_32 [1] : vector<8x8xf32> to vector<8xf32>
    %126 = vector.shape_cast %125 : vector<8xf32> to vector<8x1xf32>
    "tpu.trace_start"() <{level = 10 : i32, message = "qk,kd->qd"}> : () -> ()
    %cst_33 = arith.constant dense<0.000000e+00> : vector<8x8xf32>
    %127 = tpu.matmul %124, %116, %cst_33 {dimension_numbers = #tpu.dot_dimension_numbers<[1], [0], [0], [1], [0, 0, 1, 1], [], []>} : vector<8x8xf32>, vector<8x8xf32>, vector<8x8xf32> -> vector<8x8xf32>
    "tpu.trace_stop"() : () -> ()
    %128 = tpu.reciprocal %126 : vector<8x1xf32> -> vector<8x1xf32>
    %129 = vector.broadcast %128 : vector<8x1xf32> to vector<8x8xf32>
    %130 = arith.mulf %127, %129 : vector<8x8xf32>
    %c0_34 = arith.constant 0 : index
    %c24 = arith.constant 24 : index
    %131 = vector.load %arg9[%c0_34, %c24] : memref<8x32xf32, #tpu.memory_space<vmem>>, vector<8x8xf32>
    tpu.vector_store %arg9[%c0_34, %c24], %130 {strides = array<i32>} : memref<8x32xf32, #tpu.memory_space<vmem>>, vector<8x8xf32>,
    %c0_35 = arith.constant 0 : index
    %c0_36 = arith.constant 0 : index
    %132 = vector.load %arg9[%c0_35, %c0_36] : memref<8x32xf32, #tpu.memory_space<vmem>>, vector<8x32xf32>
    %c0_37 = arith.constant 0 : index
    %c0_38 = arith.constant 0 : index
    %133 = vector.load %arg6[%c0_37, %c0_38] : memref<32x32xf32, #tpu.memory_space<vmem>>, vector<32x32xf32>
    %cst_39 = arith.constant dense<0.000000e+00> : vector<8x32xf32>
    %134 = tpu.matmul %132, %133, %cst_39 {dimension_numbers = #tpu.dot_dimension_numbers<[1], [0], [0], [1], [0, 0, 1, 1], [], []>} : vector<8x32xf32>, vector<32x32xf32>, vector<8x32xf32> -> vector<8x32xf32>
    %c0_40 = arith.constant 0 : index
    %c0_41 = arith.constant 0 : index
    %135 = vector.load %arg7[%c0_40, %c0_41] : memref<1x32xf32, #tpu.memory_space<vmem>>, vector<1x32xf32>
    %136 = vector.broadcast %135 : vector<1x32xf32> to vector<8x32xf32>
    %137 = arith.addf %134, %136 : vector<8x32xf32>
    %c0_42 = arith.constant 0 : index
    %c0_43 = arith.constant 0 : index
    %c0_44 = arith.constant 0 : index
    %138 = vector.load %arg8[%c0_42, %c0_43, %c0_44] : memref<1x8x32xf32, #tpu.memory_space<vmem>>, vector<1x8x32xf32>
    %139 = vector.shape_cast %138 : vector<1x8x32xf32> to vector<8x32xf32>
    %140 = vector.shape_cast %137 : vector<8x32xf32> to vector<1x8x32xf32>
    tpu.vector_store %arg8[%c0_42, %c0_43, %c0_44], %140 {strides = array<i32>} : memref<1x8x32xf32, #tpu.memory_space<vmem>>, vector<1x8x32xf32>,
    return
  }
  func.func @transform_0(%arg0: i32) -> (i32, i32, i32) {
    %c0_i32 = arith.constant 0 : i32
    %c0_i32_0 = arith.constant 0 : i32
    %c0_i32_1 = arith.constant 0 : i32
    return %arg0, %c0_i32, %c0_i32_0 : i32, i32, i32
  }
  func.func @transform_1(%arg0: i32) -> (i32, i32) {
    %c0_i32 = arith.constant 0 : i32
    %c0_i32_0 = arith.constant 0 : i32
    %c0_i32_1 = arith.constant 0 : i32
    return %c0_i32, %c0_i32_0 : i32, i32
  }
  func.func @transform_2(%arg0: i32) -> (i32, i32) {
    %c0_i32 = arith.constant 0 : i32
    %c0_i32_0 = arith.constant 0 : i32
    %c0_i32_1 = arith.constant 0 : i32
    return %c0_i32, %c0_i32_0 : i32, i32
  }
  func.func @transform_3(%arg0: i32) -> (i32, i32) {
    %c0_i32 = arith.constant 0 : i32
    %c0_i32_0 = arith.constant 0 : i32
    %c0_i32_1 = arith.constant 0 : i32
    return %c0_i32, %c0_i32_0 : i32, i32
  }
  func.func @transform_4(%arg0: i32) -> (i32, i32) {
    %c0_i32 = arith.constant 0 : i32
    %c0_i32_0 = arith.constant 0 : i32
    %c0_i32_1 = arith.constant 0 : i32
    return %c0_i32, %c0_i32_0 : i32, i32
  }
  func.func @transform_5(%arg0: i32) -> (i32, i32) {
    %c0_i32 = arith.constant 0 : i32
    %c0_i32_0 = arith.constant 0 : i32
    %c0_i32_1 = arith.constant 0 : i32
    return %c0_i32, %c0_i32_0 : i32, i32
  }
  func.func @transform_6(%arg0: i32) -> (i32, i32) {
    %c0_i32 = arith.constant 0 : i32
    %c0_i32_0 = arith.constant 0 : i32
    %c0_i32_1 = arith.constant 0 : i32
    return %c0_i32, %c0_i32_0 : i32, i32
  }
  func.func @transform_7(%arg0: i32) -> (i32, i32, i32) {
    %c0_i32 = arith.constant 0 : i32
    %c0_i32_0 = arith.constant 0 : i32
    %c0_i32_1 = arith.constant 0 : i32
    return %arg0, %c0_i32, %c0_i32_0 : i32, i32, i32
  }
}

</mosaic_0001>

<llo_original>
// kernel: tpu_custom_call.1
$region0: #{tpu_custom_call.1}
  #allocation0 [shape = 'u32[]', space=smem, size = 0x4, offset = 0x4, fixed_abs, tag = 'smem constant byte address 0x4 - core index']
  #allocation1 [shape = 'u32[144,128]{1,0:T(1,128)}', space=vmem, size = 0x12000, scoped, tag = 'internal scratch']
  #allocation2 [shape = 'f32[8,32]{1,0:T(8,128)}', space=vmem, size = 0x1000, scoped, tag = 'scratch operand']
  %s0 = inlined_call_operand.hbm [shape: f32[2,8,32], index: 0, kind: input, shape index: {}]
  %s1 = inlined_call_operand.hbm [shape: f32[32,96], index: 1, kind: input, shape index: {}]
  %s2 = inlined_call_operand.vmem [shape: f32[1,96], index: 2, kind: input, shape index: {}]
  %s3 = inlined_call_operand.hbm [shape: f32[8,8], index: 3, kind: input, shape index: {}]
  %s4 = inlined_call_operand.hbm [shape: f32[8,8], index: 4, kind: input, shape index: {}]
  %s5 = inlined_call_operand.hbm [shape: f32[32,32], index: 5, kind: input, shape index: {}]
  %s6 = inlined_call_operand.vmem [shape: f32[1,32], index: 6, kind: input, shape index: {}]
  %s7 = inlined_call_operand.hbm [shape: f32[2,8,32], index: 7, kind: output, shape index: {}]
  %s8 = sld [smem:[#allocation0]]
  $region81: #{tpu_custom_call.1} parent=0
    _
  %s10 = ssub.s32 1, %s8
  %s11 = scalar_select 0, %s10, %s8
  $region1: #{tpu_custom_call.1} parent=0
    #allocation3 [shape = 'u8[8192]{0}', space=vmem, size = 0x2000, scoped, tag = 'input window, operand 0']
    #allocation4 [shape = 's32[2]{0}', space=sflag, size = 0x8, scoped, tag = 'scoped memory for tpu_custom_call.1']
    #allocation5 [shape = 's32[2]{0}', space=sflag, size = 0x8, scoped, tag = 'scoped memory for tpu_custom_call.1']
    #allocation6 [shape = 'u8[16384]{0}', space=vmem, size = 0x4000, scoped, tag = 'input window, operand 1, single buffered']
    #allocation7 [shape = 's32[1]{0}', space=sflag, size = 0x4, scoped, tag = 'scoped memory for tpu_custom_call.1']
    #allocation8 [shape = 'u8[4096]{0}', space=vmem, size = 0x1000, scoped, tag = 'input window, operand 3, single buffered']
    #allocation9 [shape = 'u8[4096]{0}', space=vmem, size = 0x1000, scoped, tag = 'input window, operand 4, single buffered']
    #allocation10 [shape = 's32[1]{0}', space=sflag, size = 0x4, scoped, tag = 'scoped memory for tpu_custom_call.1']
    #allocation11 [shape = 'u8[16384]{0}', space=vmem, size = 0x4000, scoped, tag = 'input window, operand 5, single buffered']
    #allocation12 [shape = 'u8[8192]{0}', space=vmem, size = 0x2000, scoped, tag = 'output window, operand 0']
    %12 = vsyncpa [#allocation4], 0
    %s13 = scalar_lea.sflag [#allocation4], 1
    %14 = vsyncpa %s13, 0
    %15 = vsyncpa [#allocation7], 0
    %16 = vsyncpa [#allocation10], 0
    %17 = vsyncpa [#allocation5], 0
    %s18 = scalar_lea.sflag [#allocation5], 1
    %19 = vsyncpa %s18, 0
    loop: start=0, step=1, limit=4
    $region2: #{tpu_custom_call.1} parent=1 // loop_pre_header
      _
    $region3: #{tpu_custom_call.1} parent=1 // loop_header
      %s21 = sphi 0, %s25
      %p22 = scmp.ge.s32.totalorder %s21, 4
      %s31 = sphi 0, %s33
      %s34 = sphi 0, %s31
      %s35 = sphi 0, %s34
      %s51 = sphi 0, %s35
      %s55 = sphi 0, %s55
      %s57 = sphi 0, %s55
      %s58 = sphi 0, %s57
      %s72 = sphi 0, %s58
      %s76 = sphi 0, %s76
      %s78 = sphi 0, %s76
      %s79 = sphi 0, %s78
      %s93 = sphi 0, %s79
      %s97 = sphi 0, %s97
      %s99 = sphi 0, %s97
      %s100 = sphi 0, %s99
      %s114 = sphi 0, %s100
      %s118 = sphi 0, %s118
      %s120 = sphi 0, %s118
      %s121 = sphi 0, %s120
      %s135 = sphi 0, %s121
      %s139 = sphi 0, %s139
      %s141 = sphi 0, %s139
      %s142 = sphi 0, %s141
      %s156 = sphi 0, %s142
      %s160 = sphi 0, %s160
      %s162 = sphi 0, %s160
      %s163 = sphi 0, %s162
      %s177 = sphi 0, %s163
      %s183 = sphi 0, %s185
      %s186 = sphi 0, %s183
      %s187 = sphi 0, %s186
      %s203 = sphi 0, %s187
    $region4: #{tpu_custom_call.1} parent=1 // loop_header_branch
      %24 = sbr.rel (%p22) target = $region8
    $region5: #{tpu_custom_call.1} parent=1 // loop_body
      %s26 = ssub.s32 %s21, 1
      %s27 = ssub.s32 %s21, 2
      %s28 = sadd.s32 %s21, 1
      %s29 = ssub.s32 %s21, %s28
      %p30 = scmp.eq.s32.totalorder %s29, 0
      %s32 = sadd.s32 %s31, 1
      %s33 = scalar_select %p30, %s31, %s32
      %p36 = pneg %p30
      %p37 = scmp.eq.s32.totalorder %s21, 1
      %p38 = por %p36, %p37
      %p39 = scmp.ne.s32.totalorder %s31, %s34
      %p40 = scmp.eq.s32.totalorder %s21, 0
      %p41 = por %p39, %p40
      %p42 = scmp.ne.s32.totalorder %s31, %s34
      %p43 = scmp.eq.s32.totalorder %s26, 1
      %p44 = por %p42, %p43
      %p45 = scmp.ne.s32.totalorder %s34, %s35
      %p46 = scmp.eq.s32.totalorder %s26, 0
      %p47 = por %p45, %p46
      %p48 = scmp.ne.s32.totalorder %s34, %s35
      %p49 = scmp.eq.s32.totalorder %s27, 1
      %p50 = por %p48, %p49
      %p52 = scmp.ne.s32.totalorder %s35, %s51
      %p53 = scmp.eq.s32.totalorder %s27, 0
      %p54 = por %p52, %p53
      %s56 = sadd.s32 %s55, 1
      %p59 = scmp.eq.s32.totalorder %s21, 1
      %p60 = scmp.ne.s32.totalorder %s55, %s57
      %p61 = scmp.eq.s32.totalorder %s21, 0
      %p62 = por %p60, %p61
      %p63 = scmp.ne.s32.totalorder %s55, %s57
      %p64 = scmp.eq.s32.totalorder %s26, 1
      %p65 = por %p63, %p64
      %p66 = scmp.ne.s32.totalorder %s57, %s58
      %p67 = scmp.eq.s32.totalorder %s26, 0
      %p68 = por %p66, %p67
      %p69 = scmp.ne.s32.totalorder %s57, %s58
      %p70 = scmp.eq.s32.totalorder %s27, 1
      %p71 = por %p69, %p70
      %p73 = scmp.ne.s32.totalorder %s58, %s72
      %p74 = scmp.eq.s32.totalorder %s27, 0
      %p75 = por %p73, %p74
      %s77 = sadd.s32 %s76, 1
      %p80 = scmp.eq.s32.totalorder %s21, 1
      %p81 = scmp.ne.s32.totalorder %s76, %s78
      %p82 = scmp.eq.s32.totalorder %s21, 0
      %p83 = por %p81, %p82
      %p84 = scmp.ne.s32.totalorder %s76, %s78
      %p85 = scmp.eq.s32.totalorder %s26, 1
      %p86 = por %p84, %p85
      %p87 = scmp.ne.s32.totalorder %s78, %s79
      %p88 = scmp.eq.s32.totalorder %s26, 0
      %p89 = por %p87, %p88
      %p90 = scmp.ne.s32.totalorder %s78, %s79
      %p91 = scmp.eq.s32.totalorder %s27, 1
      %p92 = por %p90, %p91
      %p94 = scmp.ne.s32.totalorder %s79, %s93
      %p95 = scmp.eq.s32.totalorder %s27, 0
      %p96 = por %p94, %p95
      %s98 = sadd.s32 %s97, 1
      %p101 = scmp.eq.s32.totalorder %s21, 1
      %p102 = scmp.ne.s32.totalorder %s97, %s99
      %p103 = scmp.eq.s32.totalorder %s21, 0
      %p104 = por %p102, %p103
      %p105 = scmp.ne.s32.totalorder %s97, %s99
      %p106 = scmp.eq.s32.totalorder %s26, 1
      %p107 = por %p105, %p106
      %p108 = scmp.ne.s32.totalorder %s99, %s100
      %p109 = scmp.eq.s32.totalorder %s26, 0
      %p110 = por %p108, %p109
      %p111 = scmp.ne.s32.totalorder %s99, %s100
      %p112 = scmp.eq.s32.totalorder %s27, 1
      %p113 = por %p111, %p112
      %p115 = scmp.ne.s32.totalorder %s100, %s114
      %p116 = scmp.eq.s32.totalorder %s27, 0
      %p117 = por %p115, %p116
      %s119 = sadd.s32 %s118, 1
      %p122 = scmp.eq.s32.totalorder %s21, 1
      %p123 = scmp.ne.s32.totalorder %s118, %s120
      %p124 = scmp.eq.s32.totalorder %s21, 0
      %p125 = por %p123, %p124
      %p126 = scmp.ne.s32.totalorder %s118, %s120
      %p127 = scmp.eq.s32.totalorder %s26, 1
      %p128 = por %p126, %p127
      %p129 = scmp.ne.s32.totalorder %s120, %s121
      %p130 = scmp.eq.s32.totalorder %s26, 0
      %p131 = por %p129, %p130
      %p132 = scmp.ne.s32.totalorder %s120, %s121
      %p133 = scmp.eq.s32.totalorder %s27, 1
      %p134 = por %p132, %p133
      %p136 = scmp.ne.s32.totalorder %s121, %s135
      %p137 = scmp.eq.s32.totalorder %s27, 0
      %p138 = por %p136, %p137
      %s140 = sadd.s32 %s139, 1
      %p143 = scmp.eq.s32.totalorder %s21, 1
      %p144 = scmp.ne.s32.totalorder %s139, %s141
      %p145 = scmp.eq.s32.totalorder %s21, 0
      %p146 = por %p144, %p145
      %p147 = scmp.ne.s32.totalorder %s139, %s141
      %p148 = scmp.eq.s32.totalorder %s26, 1
      %p149 = por %p147, %p148
      %p150 = scmp.ne.s32.totalorder %s141, %s142
      %p151 = scmp.eq.s32.totalorder %s26, 0
      %p152 = por %p150, %p151
      %p153 = scmp.ne.s32.totalorder %s141, %s142
      %p154 = scmp.eq.s32.totalorder %s27, 1
      %p155 = por %p153, %p154
      %p157 = scmp.ne.s32.totalorder %s142, %s156
      %p158 = scmp.eq.s32.totalorder %s27, 0
      %p159 = por %p157, %p158
      %s161 = sadd.s32 %s160, 1
      %p164 = scmp.eq.s32.totalorder %s21, 1
      %p165 = scmp.ne.s32.totalorder %s160, %s162
      %p166 = scmp.eq.s32.totalorder %s21, 0
      %p167 = por %p165, %p166
      %p168 = scmp.ne.s32.totalorder %s160, %s162
      %p169 = scmp.eq.s32.totalorder %s26, 1
      %p170 = por %p168, %p169
      %p171 = scmp.ne.s32.totalorder %s162, %s163
      %p172 = scmp.eq.s32.totalorder %s26, 0
      %p173 = por %p171, %p172
      %p174 = scmp.ne.s32.totalorder %s162, %s163
      %p175 = scmp.eq.s32.totalorder %s27, 1
      %p176 = por %p174, %p175
      %p178 = scmp.ne.s32.totalorder %s163, %s177
      %p179 = scmp.eq.s32.totalorder %s27, 0
      %p180 = por %p178, %p179
      %s181 = ssub.s32 %s21, %s28
      %p182 = scmp.eq.s32.totalorder %s181, 0
      %s184 = sadd.s32 %s183, 1
      %s185 = scalar_select %p182, %s183, %s184
      %p188 = pneg %p182
      %p189 = scmp.eq.s32.totalorder %s21, 1
      %p190 = por %p188, %p189
      %p191 = scmp.ne.s32.totalorder %s183, %s186
      %p192 = scmp.eq.s32.totalorder %s21, 0
      %p193 = por %p191, %p192
      %p194 = scmp.ne.s32.totalorder %s183, %s186
      %p195 = scmp.eq.s32.totalorder %s26, 1
      %p196 = por %p194, %p195
      %p197 = scmp.ne.s32.totalorder %s186, %s187
      %p198 = scmp.eq.s32.totalorder %s26, 0
      %p199 = por %p197, %p198
      %p200 = scmp.ne.s32.totalorder %s186, %s187
      %p201 = scmp.eq.s32.totalorder %s27, 1
      %p202 = por %p200, %p201
      %p204 = scmp.ne.s32.totalorder %s187, %s203
      %p205 = scmp.eq.s32.totalorder %s27, 0
      %p206 = por %p204, %p205
      %p207 = scmp.le.s32.totalorder 1, %s21
      %p208 = scmp.lt.s32.totalorder %s21, 3
      %p209 = pnand %p207, %p208
      %p210 = pneg %p209
      // Predicated region
      $region9: #{tpu_custom_call.1} parent=5 // pred_check
        _
      $region10: #{tpu_custom_call.1} parent=5 // pred_check_branch
        %212 = sbr.rel (%p209) target = $region12
      $region11: #{tpu_custom_call.1} parent=5 // pred_region
        %s213 = ssub.s32 %s21, 1
        // Predicated region
        $region13: #{tpu_custom_call.1} parent=11 // pred_check
          %p214 = pneg %p68
        $region14: #{tpu_custom_call.1} parent=11 // pred_check_branch
          %216 = sbr.rel (%p214) target = $region16
        $region15: #{tpu_custom_call.1} parent=11 // pred_region
          %s218 = ssub.s32 512, 512
          %219 = vsyncadd [#allocation7], %s218
          %s220 = sshll.u32 [#allocation6], 4
          %s221 = int_to_ptr.vmem [resolvable:$true] %s220
          %226 = dma.hbm_to_vmem [thread:$0]  %s1, 512, %s221, [#allocation7], 128, 128, 8
        $region16: #{tpu_custom_call.1} parent=11 // pred_fallthru
          _
        // Predicated region
        $region17: #{tpu_custom_call.1} parent=11 // pred_check
          %p227 = pneg %p89
        $region18: #{tpu_custom_call.1} parent=11 // pred_check_branch
          %229 = sbr.rel (%p227) target = $region20
        $region19: #{tpu_custom_call.1} parent=11 // pred_region
          _
        $region20: #{tpu_custom_call.1} parent=11 // pred_fallthru
          _
        // Predicated region
        $region21: #{tpu_custom_call.1} parent=11 // pred_check
          %p230 = pneg %p110
        $region22: #{tpu_custom_call.1} parent=11 // pred_check_branch
          %232 = sbr.rel (%p230) target = $region24
        $region23: #{tpu_custom_call.1} parent=11 // pred_region
          %s234 = ssub.s32 128, 128
          %235 = vsyncadd [#allocation7], %s234
          %s237 = sshll.u32 [#allocation8], 4
          %s238 = int_to_ptr.vmem [resolvable:$true] %s237
          %240 = dma.hbm_to_vmem [thread:$0]  %s3, 128, %s238, [#allocation7]
        $region24: #{tpu_custom_call.1} parent=11 // pred_fallthru
          _
        // Predicated region
        $region25: #{tpu_custom_call.1} parent=11 // pred_check
          %p241 = pneg %p131
        $region26: #{tpu_custom_call.1} parent=11 // pred_check_branch
          %243 = sbr.rel (%p241) target = $region28
        $region27: #{tpu_custom_call.1} parent=11 // pred_region
          %s245 = ssub.s32 128, 128
          %246 = vsyncadd [#allocation10], %s245
          %s248 = sshll.u32 [#allocation9], 4
          %s249 = int_to_ptr.vmem [resolvable:$true] %s248
          %251 = dma.hbm_to_vmem [thread:$0]  %s4, 128, %s249, [#allocation10]
        $region28: #{tpu_custom_call.1} parent=11 // pred_fallthru
          _
        // Predicated region
        $region29: #{tpu_custom_call.1} parent=11 // pred_check
          %p252 = pneg %p152
        $region30: #{tpu_custom_call.1} parent=11 // pred_check_branch
          %254 = sbr.rel (%p252) target = $region32
        $region31: #{tpu_custom_call.1} parent=11 // pred_region
          %s256 = ssub.s32 512, 512
          %257 = vsyncadd [#allocation10], %s256
          %s258 = sshll.u32 [#allocation11], 4
          %s259 = int_to_ptr.vmem [resolvable:$true] %s258
          %264 = dma.hbm_to_vmem [thread:$0]  %s5, 512, %s259, [#allocation10], 128, 128, 8
        $region32: #{tpu_custom_call.1} parent=11 // pred_fallthru
          _
        // Predicated region
        $region33: #{tpu_custom_call.1} parent=11 // pred_check
          %p265 = pneg %p173
        $region34: #{tpu_custom_call.1} parent=11 // pred_check_branch
          %267 = sbr.rel (%p265) target = $region36
        $region35: #{tpu_custom_call.1} parent=11 // pred_region
          _
        $region36: #{tpu_custom_call.1} parent=11 // pred_fallthru
          _
      $region12: #{tpu_custom_call.1} parent=5 // pred_fallthru
        _
      %p268 = scmp.lt.s32.totalorder %s21, 2
      // Predicated region
      $region37: #{tpu_custom_call.1} parent=5 // pred_check
        %p269 = pneg %p268
      $region38: #{tpu_custom_call.1} parent=5 // pred_check_branch
        %271 = sbr.rel (%p269) target = $region40
      $region39: #{tpu_custom_call.1} parent=5 // pred_region
        // Predicated region
        $region41: #{tpu_custom_call.1} parent=39 // pred_check
          %p272 = pneg %p41
        $region42: #{tpu_custom_call.1} parent=39 // pred_check_branch
          %274 = sbr.rel (%p272) target = $region44
        $region43: #{tpu_custom_call.1} parent=39 // pred_region
          %s275 = sand.u32 %s31, 1
          %s276 = scalar_lea.sflag [#allocation4], %s275
          %s277 = sand.u32 %s31, 1
          %s278 = smul.addr %s277, 8
          %s279 = scalar_lea.vmem [#allocation3], %s278
          %s281 = ssub.s32 128, 128
          %282 = vsyncadd %s276, %s281
          %s283 = smul.addr %s21, 128
          %s284 = scalar_lea.hbm %s0, %s283
          %s286 = sshll.u32 %s279, 4
          %s287 = int_to_ptr.vmem [resolvable:$true] %s286
          %289 = dma.hbm_to_vmem [thread:$0]  %s284, 128, %s287, %s276
        $region44: #{tpu_custom_call.1} parent=39 // pred_fallthru
          _
      $region40: #{tpu_custom_call.1} parent=5 // pred_fallthru
        _
      %p290 = scmp.le.s32.totalorder 1, %s21
      %p291 = scmp.lt.s32.totalorder %s21, 3
      %p292 = pnand %p290, %p291
      %p293 = pneg %p292
      // Predicated region
      $region45: #{tpu_custom_call.1} parent=5 // pred_check
        _
      $region46: #{tpu_custom_call.1} parent=5 // pred_check_branch
        %295 = sbr.rel (%p292) target = $region48
      $region47: #{tpu_custom_call.1} parent=5 // pred_region
        %s296 = ssub.s32 %s21, 1
        %s297 = sand.u32 %s34, 1
        %s298 = scalar_lea.sflag [#allocation4], %s297
        %s299 = sand.u32 %s34, 1
        %s300 = smul.addr %s299, 8
        %s301 = scalar_lea.vmem [#allocation3], %s300
        // Predicated region
        $region49: #{tpu_custom_call.1} parent=47 // pred_check
          %p302 = pneg %p47
        $region50: #{tpu_custom_call.1} parent=47 // pred_check_branch
          %304 = sbr.rel (%p302) target = $region52
        $region51: #{tpu_custom_call.1} parent=47 // pred_region
          %305 = dma.done %s298, 128
        $region52: #{tpu_custom_call.1} parent=47 // pred_fallthru
          _
        // Predicated region
        $region53: #{tpu_custom_call.1} parent=47 // pred_check
          %p306 = pneg %p68
        $region54: #{tpu_custom_call.1} parent=47 // pred_check_branch
          %308 = sbr.rel (%p306) target = $region56
        $region55: #{tpu_custom_call.1} parent=47 // pred_region
          %309 = dma.done [#allocation7], 512
        $region56: #{tpu_custom_call.1} parent=47 // pred_fallthru
          _
        // Predicated region
        $region57: #{tpu_custom_call.1} parent=47 // pred_check
          %p310 = pneg %p110
        $region58: #{tpu_custom_call.1} parent=47 // pred_check_branch
          %312 = sbr.rel (%p310) target = $region60
        $region59: #{tpu_custom_call.1} parent=47 // pred_region
          %313 = dma.done [#allocation7], 128
        $region60: #{tpu_custom_call.1} parent=47 // pred_fallthru
          _
        // Predicated region
        $region61: #{tpu_custom_call.1} parent=47 // pred_check
          %p314 = pneg %p131
        $region62: #{tpu_custom_call.1} parent=47 // pred_check_branch
          %316 = sbr.rel (%p314) target = $region64
        $region63: #{tpu_custom_call.1} parent=47 // pred_region
          %317 = dma.done [#allocation10], 128
        $region64: #{tpu_custom_call.1} parent=47 // pred_fallthru
          _
        // Predicated region
        $region65: #{tpu_custom_call.1} parent=47 // pred_check
          %p318 = pneg %p152
        $region66: #{tpu_custom_call.1} parent=47 // pred_check_branch
          %320 = sbr.rel (%p318) target = $region68
        $region67: #{tpu_custom_call.1} parent=47 // pred_region
          %321 = dma.done [#allocation10], 512
        $region68: #{tpu_custom_call.1} parent=47 // pred_fallthru
          _
        %s322 = sand.u32 %s34, 1
        %s323 = scalar_lea.sflag [#allocation4], %s322
        %s324 = sand.u32 %s34, 1
        %s325 = smul.addr %s324, 8
        %s326 = scalar_lea.vmem [#allocation3], %s325
        %p327 = pneg %p47
        %p328 = pneg %p44
        %p329 = pneg %p68
        %p330 = pneg %p65
        %p331 = pneg %p89
        %p332 = pneg %p86
        %p333 = pneg %p110
        %p334 = pneg %p107
        %p335 = pneg %p131
        %p336 = pneg %p128
        %p337 = pneg %p152
        %p338 = pneg %p149
        %p339 = pneg %p173
        %p340 = pneg %p170
        %p341 = pneg %p199
        %p342 = pneg %p196
        %s343 = sand.u32 %s186, 1
        %s344 = scalar_lea.sflag [#allocation5], %s343
        %s345 = sand.u32 %s186, 1
        %s346 = smul.addr %s345, 8
        %s347 = scalar_lea.vmem [#allocation12], %s346
        %v348 = vld [vmem:[%s301] sm:$0xff]
        %v349 = vld [vmem:[#allocation6] sm:$0xff]
        %v350 = vld [vmem:[#allocation6 + $0x8] sm:$0xff]
        %v351 = vld [vmem:[#allocation6 + $0x10] sm:$0xff]
        %v352 = vld [vmem:[#allocation6 + $0x18] sm:$0xff]
        %v353 = vld [vmem:[%s2] sm:$0x1]
        %v355 = vlaneseq
        %v356 = vshrl.u32 %v355, 7
        %v357 = vsub.s32 0, %v356
        %v358 = vrot.slane %v353, %v357
        %vm360 = vcmask 261120
        %v362 = vsel %vm360, %v348, 0
        %364 = vmatprep.subr.mxu0 0.0
        %365 = vmatpush1.msra.mxu0 0.0
        %366 = vmatprep.subr.mxu0 0.0
        %367 = vmatpush1.msra.mxu0 0.0
        %368 = vmatprep.subr.mxu0 0.0
        %369 = vmatpush1.msra.mxu0 0.0
        %370 = vmatprep.subr.mxu0 0.0
        %371 = vmatpush1.msra.mxu0 0.0
        %372 = vmatprep.subr.mxu0 0.0
        %373 = vmatpush1.msra.mxu0 0.0
        %374 = vmatprep.subr.mxu0 0.0
        %375 = vmatpush1.msra.mxu0 0.0
        %376 = vmatprep.subr.mxu0 0.0
        %377 = vmatpush1.msra.mxu0 0.0
        %378 = vmatprep.subr.mxu0 0.0
        %379 = vmatpush1.msra.mxu0 0.0
        %380 = vmatprep.subr.mxu0 0.0
        %381 = vmatpush1.msra.mxu0 0.0
        %382 = vmatprep.subr.mxu0 0.0
        %383 = vmatpush1.msra.mxu0 0.0
        %384 = vmatprep.subr.mxu0 0.0
        %385 = vmatpush1.msra.mxu0 0.0
        %386 = vmatprep.subr.mxu0 0.0
        %387 = vmatpush1.msra.mxu0 0.0
        %388 = vmatprep.subr.mxu0 0.0
        %389 = vmatpush1.msra.mxu0 %v352
        %390 = vmatprep.subr.mxu0 0.0
        %391 = vmatpush1.msra.mxu0 %v351
        %392 = vmatprep.subr.mxu0 0.0
        %393 = vmatpush1.msra.mxu0 %v350
        %394 = vmatprep.subr.mxu0 0.0
        %395 = vmatpush1.msra.mxu0 %v349
        %396 = vmatprep.subr.mxu0 0.0
        %397 = vmatpush2.msra.mxu0 0.0
        %398 = vmatprep.subr.mxu0 0.0
        %399 = vmatpush2.msra.mxu0 0.0
        %400 = vmatprep.subr.mxu0 0.0
        %401 = vmatpush2.msra.mxu0 0.0
        %402 = vmatprep.subr.mxu0 0.0
        %403 = vmatpush2.msra.mxu0 0.0
        %404 = vmatprep.subr.mxu0 0.0
        %405 = vmatpush2.msra.mxu0 0.0
        %406 = vmatprep.subr.mxu0 0.0
        %407 = vmatpush2.msra.mxu0 0.0
        %408 = vmatprep.subr.mxu0 0.0
        %409 = vmatpush2.msra.mxu0 0.0
        %410 = vmatprep.subr.mxu0 0.0
        %411 = vmatpush2.msra.mxu0 0.0
        %412 = vmatprep.subr.mxu0 0.0
        %413 = vmatpush2.msra.mxu0 0.0
        %414 = vmatprep.subr.mxu0 0.0
        %415 = vmatpush2.msra.mxu0 0.0
        %416 = vmatprep.subr.mxu0 0.0
        %417 = vmatpush2.msra.mxu0 0.0
        %418 = vmatprep.subr.mxu0 0.0
        %419 = vmatpush2.msra.mxu0 0.0
        %420 = vmatprep.subr.mxu0 0.0
        %421 = vmatpush2.msra.mxu0 0.0
        %422 = vmatprep.subr.mxu0 0.0
        %423 = vmatpush2.msra.mxu0 0.0
        %424 = vmatprep.subr.mxu0 0.0
        %425 = vmatpush2.msra.mxu0 0.0
        %426 = vmatprep.subr.mxu0 0.0
        %427 = vmatpush2.msra.mxu0 0.0
        %428 = vmatprep.mubr.f32.mxu0 0.0
        %429 = vmatmul.mubr.f32.gmra.mxu0 %v362
        %v430 = vpop.f32.mrf.mxu0
        %v431 = vadd.f32 %v358, %v430
        %v432 = vpop.f32.mrf.mxu0
        %433 = vdwg.mxu0
        %v434 = vld [vmem:[#allocation8] sm:$0xff]
        %v435 = vld [vmem:[#allocation9] sm:$0xff]
        %v436 = vlaneseq
        %v437 = vshrl.u32 %v436, 7
        %v438 = vlaneseq
        %v439 = vand.u32 %v438, 127
        %vm440 = vcmp.le.s32.totalorder %v439, %v437
        %442 = vrot.lane.b32.xlu0 %v431, 124
        %v443 = vpop.permute.xlu0 %442
        %445 = vrot.lane.b32.xlu0 %v431, 4
        %v446 = vpop.permute.xlu0 %445
        %vm448 = vcmask 31744
        %v449 = vsel %vm448, %v443, %v446
        %v450 = vmul.f32 %v431, %v434
        %v451 = vmul.f32 %v449, %v435
        %v452 = vadd.f32 %v450, %v451
        %453 = vrot.lane.b32.xlu0 %v431, 92
        %v454 = vpop.permute.xlu0 %453
        %456 = vrot.lane.b32.xlu0 %v431, 100
        %v457 = vpop.permute.xlu0 %456
        %v459 = vsel %vm448, %v454, %v457
        %461 = vrot.lane.b32.xlu0 %v434, 32
        %v462 = vpop.permute.xlu0 %461
        %v464 = vmul.f32 %v431, %v462
        %v465 = vmul.f32 %v459, %v435
        %467 = vrot.lane.b32.xlu0 %v465, 32
        %v468 = vpop.permute.xlu0 %467
        %v470 = vadd.f32 %v464, %v468
        %472 = vrot.lane.b32.xlu0 %v470, 96
        %v473 = vpop.permute.xlu0 %472
        %vm474 = vcmask 64512
        %v476 = vsel %vm474, %v452, 0
        %v478 = vsel %vm474, %v473, 0
        %480 = vmatprep.subr.mxu0 0.0
        %481 = vmatpush1.xpose.msra.mxu0 0.0
        %482 = vmatprep.subr.mxu0 0.0
        %483 = vmatpush1.xpose.msra.mxu0 0.0
        %484 = vmatprep.subr.mxu0 0.0
        %485 = vmatpush1.xpose.msra.mxu0 0.0
        %486 = vmatprep.subr.mxu0 0.0
        %487 = vmatpush1.xpose.msra.mxu0 0.0
        %488 = vmatprep.subr.mxu0 0.0
        %489 = vmatpush1.xpose.msra.mxu0 0.0
        %490 = vmatprep.subr.mxu0 0.0
        %491 = vmatpush1.xpose.msra.mxu0 0.0
        %492 = vmatprep.subr.mxu0 0.0
        %493 = vmatpush1.xpose.msra.mxu0 0.0
        %494 = vmatprep.subr.mxu0 0.0
        %495 = vmatpush1.xpose.msra.mxu0 0.0
        %496 = vmatprep.subr.mxu0 0.0
        %497 = vmatpush1.xpose.msra.mxu0 0.0
        %498 = vmatprep.subr.mxu0 0.0
        %499 = vmatpush1.xpose.msra.mxu0 0.0
        %500 = vmatprep.subr.mxu0 0.0
        %501 = vmatpush1.xpose.msra.mxu0 0.0
        %502 = vmatprep.subr.mxu0 0.0
        %503 = vmatpush1.xpose.msra.mxu0 0.0
        %504 = vmatprep.subr.mxu0 0.0
        %505 = vmatpush1.xpose.msra.mxu0 0.0
        %506 = vmatprep.subr.mxu0 0.0
        %507 = vmatpush1.xpose.msra.mxu0 0.0
        %508 = vmatprep.subr.mxu0 0.0
        %509 = vmatpush1.xpose.msra.mxu0 0.0
        %510 = vmatprep.subr.mxu0 0.0
        %511 = vmatpush1.xpose.msra.mxu0 %v478
        %512 = vmatprep.subr.mxu0 0.0
        %513 = vmatpush2.xpose.msra.mxu0 0.0
        %514 = vmatprep.subr.mxu0 0.0
        %515 = vmatpush2.xpose.msra.mxu0 0.0
        %516 = vmatprep.subr.mxu0 0.0
        %517 = vmatpush2.xpose.msra.mxu0 0.0
        %518 = vmatprep.subr.mxu0 0.0
        %519 = vmatpush2.xpose.msra.mxu0 0.0
        %520 = vmatprep.subr.mxu0 0.0
        %521 = vmatpush2.xpose.msra.mxu0 0.0
        %522 = vmatprep.subr.mxu0 0.0
        %523 = vmatpush2.xpose.msra.mxu0 0.0
        %524 = vmatprep.subr.mxu0 0.0
        %525 = vmatpush2.xpose.msra.mxu0 0.0
        %526 = vmatprep.subr.mxu0 0.0
        %527 = vmatpush2.xpose.msra.mxu0 0.0
        %528 = vmatprep.subr.mxu0 0.0
        %529 = vmatpush2.xpose.msra.mxu0 0.0
        %530 = vmatprep.subr.mxu0 0.0
        %531 = vmatpush2.xpose.msra.mxu0 0.0
        %532 = vmatprep.subr.mxu0 0.0
        %533 = vmatpush2.xpose.msra.mxu0 0.0
        %534 = vmatprep.subr.mxu0 0.0
        %535 = vmatpush2.xpose.msra.mxu0 0.0
        %536 = vmatprep.subr.mxu0 0.0
        %537 = vmatpush2.xpose.msra.mxu0 0.0
        %538 = vmatprep.subr.mxu0 0.0
        %539 = vmatpush2.xpose.msra.mxu0 0.0
        %540 = vmatprep.subr.mxu0 0.0
        %541 = vmatpush2.xpose.msra.mxu0 0.0
        %542 = vmatprep.subr.mxu0 0.0
        %543 = vmatpush2.xpose.msra.mxu0 0.0
        %544 = vmatprep.mubr.f32.mxu0 0.0
        %545 = vmatmul.mubr.f32.gmra.mxu0 %v476
        %v546 = vpop.f32.mrf.mxu0
        %v547 = vadd.f32 0.0, %v546
        %v548 = vpop.f32.mrf.mxu0
        %549 = vdwg.mxu0
        %v550 = vsel %vm440, %v547, -1e+30
        %v551 = vsel %vm474, %v550, -inf
        %552 = vmax.xlane.f32.xlu0 %v551
        %v553 = vpop.xlane.xlu0 %552
        %v554 = vsub.f32 %v550, %v553
        %v555 = vmul.f32 %v554, 1.442695
        %v556 = vpow.pop %v555
        %v557 = vsel %vm474, %v556, 0.0
        %558 = vadd.xlane.f32.xlu0 %v557
        %v559 = vpop.xlane.xlu0 %558
        %560 = vrot.lane.b32.xlu0 %v431, 64
        %v561 = vpop.permute.xlu0 %560
        %v564 = vsel %vm474, %v556, 0
        %566 = vmatprep.subr.mxu0 0.0
        %567 = vmatpush1.msra.mxu0 0.0
        %568 = vmatprep.subr.mxu0 0.0
        %569 = vmatpush1.msra.mxu0 0.0
        %570 = vmatprep.subr.mxu0 0.0
        %571 = vmatpush1.msra.mxu0 0.0
        %572 = vmatprep.subr.mxu0 0.0
        %573 = vmatpush1.msra.mxu0 0.0
        %574 = vmatprep.subr.mxu0 0.0
        %575 = vmatpush1.msra.mxu0 0.0
        %576 = vmatprep.subr.mxu0 0.0
        %577 = vmatpush1.msra.mxu0 0.0
        %578 = vmatprep.subr.mxu0 0.0
        %579 = vmatpush1.msra.mxu0 0.0
        %580 = vmatprep.subr.mxu0 0.0
        %581 = vmatpush1.msra.mxu0 0.0
        %582 = vmatprep.subr.mxu0 0.0
        %583 = vmatpush1.msra.mxu0 0.0
        %584 = vmatprep.subr.mxu0 0.0
        %585 = vmatpush1.msra.mxu0 0.0
        %586 = vmatprep.subr.mxu0 0.0
        %587 = vmatpush1.msra.mxu0 0.0
        %588 = vmatprep.subr.mxu0 0.0
        %589 = vmatpush1.msra.mxu0 0.0
        %590 = vmatprep.subr.mxu0 0.0
        %591 = vmatpush1.msra.mxu0 0.0
        %592 = vmatprep.subr.mxu0 0.0
        %593 = vmatpush1.msra.mxu0 0.0
        %594 = vmatprep.subr.mxu0 0.0
        %595 = vmatpush1.msra.mxu0 0.0
        %596 = vmatprep.subr.mxu0 0.0
        %597 = vmatpush1.msra.mxu0 %v561
        %598 = vmatprep.subr.mxu0 0.0
        %599 = vmatpush2.msra.mxu0 0.0
        %600 = vmatprep.subr.mxu0 0.0
        %601 = vmatpush2.msra.mxu0 0.0
        %602 = vmatprep.subr.mxu0 0.0
        %603 = vmatpush2.msra.mxu0 0.0
        %604 = vmatprep.subr.mxu0 0.0
        %605 = vmatpush2.msra.mxu0 0.0
        %606 = vmatprep.subr.mxu0 0.0
        %607 = vmatpush2.msra.mxu0 0.0
        %608 = vmatprep.subr.mxu0 0.0
        %609 = vmatpush2.msra.mxu0 0.0
        %610 = vmatprep.subr.mxu0 0.0
        %611 = vmatpush2.msra.mxu0 0.0
        %612 = vmatprep.subr.mxu0 0.0
        %613 = vmatpush2.msra.mxu0 0.0
        %614 = vmatprep.subr.mxu0 0.0
        %615 = vmatpush2.msra.mxu0 0.0
        %616 = vmatprep.subr.mxu0 0.0
        %617 = vmatpush2.msra.mxu0 0.0
        %618 = vmatprep.subr.mxu0 0.0
        %619 = vmatpush2.msra.mxu0 0.0
        %620 = vmatprep.subr.mxu0 0.0
        %621 = vmatpush2.msra.mxu0 0.0
        %622 = vmatprep.subr.mxu0 0.0
        %623 = vmatpush2.msra.mxu0 0.0
        %624 = vmatprep.subr.mxu0 0.0
        %625 = vmatpush2.msra.mxu0 0.0
        %626 = vmatprep.subr.mxu0 0.0
        %627 = vmatpush2.msra.mxu0 0.0
        %628 = vmatprep.subr.mxu0 0.0
        %629 = vmatpush2.msra.mxu0 0.0
        %630 = vmatprep.mubr.f32.mxu0 0.0
        %631 = vmatmul.mubr.f32.gmra.mxu0 %v564
        %v632 = vpop.f32.mrf.mxu0
        %v633 = vadd.f32 0.0, %v632
        %v634 = vpop.f32.mrf.mxu0
        %635 = vdwg.mxu0
        %v636 = vrcp.pop %v559
        %v637 = vmul.f32 %v633, %v636
        %638 = vst.msk [vmem:[#allocation2] sm:$0xff] %vm474, %v637
        %639 = vrot.lane.b32.xlu0 %v431, 116
        %v640 = vpop.permute.xlu0 %639
        %v642 = vsel %vm448, %v640, %v443
        %643 = vrot.lane.b32.xlu0 %v434, 8
        %v644 = vpop.permute.xlu0 %643
        %v646 = vmul.f32 %v431, %v644
        %v647 = vmul.f32 %v642, %v435
        %649 = vrot.lane.b32.xlu0 %v647, 8
        %v650 = vpop.permute.xlu0 %649
        %v652 = vadd.f32 %v646, %v650
        %653 = vrot.lane.b32.xlu0 %v431, 84
        %v654 = vpop.permute.xlu0 %653
        %v656 = vsel %vm448, %v654, %v454
        %657 = vrot.lane.b32.xlu0 %v434, 40
        %v658 = vpop.permute.xlu0 %657
        %v660 = vmul.f32 %v431, %v658
        %v661 = vmul.f32 %v656, %v435
        %663 = vrot.lane.b32.xlu0 %v661, 40
        %v664 = vpop.permute.xlu0 %663
        %v666 = vadd.f32 %v660, %v664
        %668 = vrot.lane.b32.xlu0 %v652, 120
        %v669 = vpop.permute.xlu0 %668
        %671 = vrot.lane.b32.xlu0 %v666, 88
        %v672 = vpop.permute.xlu0 %671
        %v673 = vsel %vm474, %v669, 0
        %v675 = vsel %vm474, %v672, 0
        %677 = vmatprep.subr.mxu0 0.0
        %678 = vmatpush1.xpose.msra.mxu0 0.0
        %679 = vmatprep.subr.mxu0 0.0
        %680 = vmatpush1.xpose.msra.mxu0 0.0
        %681 = vmatprep.subr.mxu0 0.0
        %682 = vmatpush1.xpose.msra.mxu0 0.0
        %683 = vmatprep.subr.mxu0 0.0
        %684 = vmatpush1.xpose.msra.mxu0 0.0
        %685 = vmatprep.subr.mxu0 0.0
        %686 = vmatpush1.xpose.msra.mxu0 0.0
        %687 = vmatprep.subr.mxu0 0.0
        %688 = vmatpush1.xpose.msra.mxu0 0.0
        %689 = vmatprep.subr.mxu0 0.0
        %690 = vmatpush1.xpose.msra.mxu0 0.0
        %691 = vmatprep.subr.mxu0 0.0
        %692 = vmatpush1.xpose.msra.mxu0 0.0
        %693 = vmatprep.subr.mxu0 0.0
        %694 = vmatpush1.xpose.msra.mxu0 0.0
        %695 = vmatprep.subr.mxu0 0.0
        %696 = vmatpush1.xpose.msra.mxu0 0.0
        %697 = vmatprep.subr.mxu0 0.0
        %698 = vmatpush1.xpose.msra.mxu0 0.0
        %699 = vmatprep.subr.mxu0 0.0
        %700 = vmatpush1.xpose.msra.mxu0 0.0
        %701 = vmatprep.subr.mxu0 0.0
        %702 = vmatpush1.xpose.msra.mxu0 0.0
        %703 = vmatprep.subr.mxu0 0.0
        %704 = vmatpush1.xpose.msra.mxu0 0.0
        %705 = vmatprep.subr.mxu0 0.0
        %706 = vmatpush1.xpose.msra.mxu0 0.0
        %707 = vmatprep.subr.mxu0 0.0
        %708 = vmatpush1.xpose.msra.mxu0 %v675
        %709 = vmatprep.subr.mxu0 0.0
        %710 = vmatpush2.xpose.msra.mxu0 0.0
        %711 = vmatprep.subr.mxu0 0.0
        %712 = vmatpush2.xpose.msra.mxu0 0.0
        %713 = vmatprep.subr.mxu0 0.0
        %714 = vmatpush2.xpose.msra.mxu0 0.0
        %715 = vmatprep.subr.mxu0 0.0
        %716 = vmatpush2.xpose.msra.mxu0 0.0
        %717 = vmatprep.subr.mxu0 0.0
        %718 = vmatpush2.xpose.msra.mxu0 0.0
        %719 = vmatprep.subr.mxu0 0.0
        %720 = vmatpush2.xpose.msra.mxu0 0.0
        %721 = vmatprep.subr.mxu0 0.0
        %722 = vmatpush2.xpose.msra.mxu0 0.0
        %723 = vmatprep.subr.mxu0 0.0
        %724 = vmatpush2.xpose.msra.mxu0 0.0
        %725 = vmatprep.subr.mxu0 0.0
        %726 = vmatpush2.xpose.msra.mxu0 0.0
        %727 = vmatprep.subr.mxu0 0.0
        %728 = vmatpush2.xpose.msra.mxu0 0.0
        %729 = vmatprep.subr.mxu0 0.0
        %730 = vmatpush2.xpose.msra.mxu0 0.0
        %731 = vmatprep.subr.mxu0 0.0
        %732 = vmatpush2.xpose.msra.mxu0 0.0
        %733 = vmatprep.subr.mxu0 0.0
        %734 = vmatpush2.xpose.msra.mxu0 0.0
        %735 = vmatprep.subr.mxu0 0.0
        %736 = vmatpush2.xpose.msra.mxu0 0.0
        %737 = vmatprep.subr.mxu0 0.0
        %738 = vmatpush2.xpose.msra.mxu0 0.0
        %739 = vmatprep.subr.mxu0 0.0
        %740 = vmatpush2.xpose.msra.mxu0 0.0
        %741 = vmatprep.mubr.f32.mxu0 0.0
        %742 = vmatmul.mubr.f32.gmra.mxu0 %v673
        %v743 = vpop.f32.mrf.mxu0
        %v744 = vadd.f32 0.0, %v743
        %v745 = vpop.f32.mrf.mxu0
        %746 = vdwg.mxu0
        %v747 = vsel %vm440, %v744, -1e+30
        %v748 = vsel %vm474, %v747, -inf
        %749 = vmax.xlane.f32.xlu0 %v748
        %v750 = vpop.xlane.xlu0 %749
        %v751 = vsub.f32 %v747, %v750
        %v752 = vmul.f32 %v751, 1.442695
        %v753 = vpow.pop %v752
        %v754 = vsel %vm474, %v753, 0.0
        %755 = vadd.xlane.f32.xlu0 %v754
        %v756 = vpop.xlane.xlu0 %755
        %757 = vrot.lane.b32.xlu0 %v431, 56
        %v758 = vpop.permute.xlu0 %757
        %v761 = vsel %vm474, %v753, 0
        %763 = vmatprep.subr.mxu0 0.0
        %764 = vmatpush1.msra.mxu0 0.0
        %765 = vmatprep.subr.mxu0 0.0
        %766 = vmatpush1.msra.mxu0 0.0
        %767 = vmatprep.subr.mxu0 0.0
        %768 = vmatpush1.msra.mxu0 0.0
        %769 = vmatprep.subr.mxu0 0.0
        %770 = vmatpush1.msra.mxu0 0.0
        %771 = vmatprep.subr.mxu0 0.0
        %772 = vmatpush1.msra.mxu0 0.0
        %773 = vmatprep.subr.mxu0 0.0
        %774 = vmatpush1.msra.mxu0 0.0
        %775 = vmatprep.subr.mxu0 0.0
        %776 = vmatpush1.msra.mxu0 0.0
        %777 = vmatprep.subr.mxu0 0.0
        %778 = vmatpush1.msra.mxu0 0.0
        %779 = vmatprep.subr.mxu0 0.0
        %780 = vmatpush1.msra.mxu0 0.0
        %781 = vmatprep.subr.mxu0 0.0
        %782 = vmatpush1.msra.mxu0 0.0
        %783 = vmatprep.subr.mxu0 0.0
        %784 = vmatpush1.msra.mxu0 0.0
        %785 = vmatprep.subr.mxu0 0.0
        %786 = vmatpush1.msra.mxu0 0.0
        %787 = vmatprep.subr.mxu0 0.0
        %788 = vmatpush1.msra.mxu0 0.0
        %789 = vmatprep.subr.mxu0 0.0
        %790 = vmatpush1.msra.mxu0 0.0
        %791 = vmatprep.subr.mxu0 0.0
        %792 = vmatpush1.msra.mxu0 0.0
        %793 = vmatprep.subr.mxu0 0.0
        %794 = vmatpush1.msra.mxu0 %v758
        %795 = vmatprep.subr.mxu0 0.0
        %796 = vmatpush2.msra.mxu0 0.0
        %797 = vmatprep.subr.mxu0 0.0
        %798 = vmatpush2.msra.mxu0 0.0
        %799 = vmatprep.subr.mxu0 0.0
        %800 = vmatpush2.msra.mxu0 0.0
        %801 = vmatprep.subr.mxu0 0.0
        %802 = vmatpush2.msra.mxu0 0.0
        %803 = vmatprep.subr.mxu0 0.0
        %804 = vmatpush2.msra.mxu0 0.0
        %805 = vmatprep.subr.mxu0 0.0
        %806 = vmatpush2.msra.mxu0 0.0
        %807 = vmatprep.subr.mxu0 0.0
        %808 = vmatpush2.msra.mxu0 0.0
        %809 = vmatprep.subr.mxu0 0.0
        %810 = vmatpush2.msra.mxu0 0.0
        %811 = vmatprep.subr.mxu0 0.0
        %812 = vmatpush2.msra.mxu0 0.0
        %813 = vmatprep.subr.mxu0 0.0
        %814 = vmatpush2.msra.mxu0 0.0
        %815 = vmatprep.subr.mxu0 0.0
        %816 = vmatpush2.msra.mxu0 0.0
        %817 = vmatprep.subr.mxu0 0.0
        %818 = vmatpush2.msra.mxu0 0.0
        %819 = vmatprep.subr.mxu0 0.0
        %820 = vmatpush2.msra.mxu0 0.0
        %821 = vmatprep.subr.mxu0 0.0
        %822 = vmatpush2.msra.mxu0 0.0
        %823 = vmatprep.subr.mxu0 0.0
        %824 = vmatpush2.msra.mxu0 0.0
        %825 = vmatprep.subr.mxu0 0.0
        %826 = vmatpush2.msra.mxu0 0.0
        %827 = vmatprep.mubr.f32.mxu0 0.0
        %828 = vmatmul.mubr.f32.gmra.mxu0 %v761
        %v829 = vpop.f32.mrf.mxu0
        %v830 = vadd.f32 0.0, %v829
        %v831 = vpop.f32.mrf.mxu0
        %832 = vdwg.mxu0
        %v833 = vrcp.pop %v756
        %v834 = vmul.f32 %v830, %v833
        %836 = vrot.lane.b32.xlu0 %v834, 8
        %v837 = vpop.permute.xlu0 %836
        %vm839 = vcmask 130112
        %840 = vst.msk [vmem:[#allocation2] sm:$0xff] %vm839, %v837
        %841 = vrot.lane.b32.xlu0 %v431, 108
        %v842 = vpop.permute.xlu0 %841
        %v844 = vsel %vm448, %v842, %v640
        %845 = vrot.lane.b32.xlu0 %v434, 16
        %v846 = vpop.permute.xlu0 %845
        %v848 = vmul.f32 %v431, %v846
        %v849 = vmul.f32 %v844, %v435
        %851 = vrot.lane.b32.xlu0 %v849, 16
        %v852 = vpop.permute.xlu0 %851
        %v854 = vadd.f32 %v848, %v852
        %855 = vrot.lane.b32.xlu0 %v431, 76
        %v856 = vpop.permute.xlu0 %855
        %v858 = vsel %vm448, %v856, %v654
        %859 = vrot.lane.b32.xlu0 %v434, 48
        %v860 = vpop.permute.xlu0 %859
        %v862 = vmul.f32 %v431, %v860
        %v863 = vmul.f32 %v858, %v435
        %865 = vrot.lane.b32.xlu0 %v863, 48
        %v866 = vpop.permute.xlu0 %865
        %v868 = vadd.f32 %v862, %v866
        %870 = vrot.lane.b32.xlu0 %v854, 112
        %v871 = vpop.permute.xlu0 %870
        %873 = vrot.lane.b32.xlu0 %v868, 80
        %v874 = vpop.permute.xlu0 %873
        %v875 = vsel %vm474, %v871, 0
        %v877 = vsel %vm474, %v874, 0
        %879 = vmatprep.subr.mxu0 0.0
        %880 = vmatpush1.xpose.msra.mxu0 0.0
        %881 = vmatprep.subr.mxu0 0.0
        %882 = vmatpush1.xpose.msra.mxu0 0.0
        %883 = vmatprep.subr.mxu0 0.0
        %884 = vmatpush1.xpose.msra.mxu0 0.0
        %885 = vmatprep.subr.mxu0 0.0
        %886 = vmatpush1.xpose.msra.mxu0 0.0
        %887 = vmatprep.subr.mxu0 0.0
        %888 = vmatpush1.xpose.msra.mxu0 0.0
        %889 = vmatprep.subr.mxu0 0.0
        %890 = vmatpush1.xpose.msra.mxu0 0.0
        %891 = vmatprep.subr.mxu0 0.0
        %892 = vmatpush1.xpose.msra.mxu0 0.0
        %893 = vmatprep.subr.mxu0 0.0
        %894 = vmatpush1.xpose.msra.mxu0 0.0
        %895 = vmatprep.subr.mxu0 0.0
        %896 = vmatpush1.xpose.msra.mxu0 0.0
        %897 = vmatprep.subr.mxu0 0.0
        %898 = vmatpush1.xpose.msra.mxu0 0.0
        %899 = vmatprep.subr.mxu0 0.0
        %900 = vmatpush1.xpose.msra.mxu0 0.0
        %901 = vmatprep.subr.mxu0 0.0
        %902 = vmatpush1.xpose.msra.mxu0 0.0
        %903 = vmatprep.subr.mxu0 0.0
        %904 = vmatpush1.xpose.msra.mxu0 0.0
        %905 = vmatprep.subr.mxu0 0.0
        %906 = vmatpush1.xpose.msra.mxu0 0.0
        %907 = vmatprep.subr.mxu0 0.0
        %908 = vmatpush1.xpose.msra.mxu0 0.0
        %909 = vmatprep.subr.mxu0 0.0
        %910 = vmatpush1.xpose.msra.mxu0 %v877
        %911 = vmatprep.subr.mxu0 0.0
        %912 = vmatpush2.xpose.msra.mxu0 0.0
        %913 = vmatprep.subr.mxu0 0.0
        %914 = vmatpush2.xpose.msra.mxu0 0.0
        %915 = vmatprep.subr.mxu0 0.0
        %916 = vmatpush2.xpose.msra.mxu0 0.0
        %917 = vmatprep.subr.mxu0 0.0
        %918 = vmatpush2.xpose.msra.mxu0 0.0
        %919 = vmatprep.subr.mxu0 0.0
        %920 = vmatpush2.xpose.msra.mxu0 0.0
        %921 = vmatprep.subr.mxu0 0.0
        %922 = vmatpush2.xpose.msra.mxu0 0.0
        %923 = vmatprep.subr.mxu0 0.0
        %924 = vmatpush2.xpose.msra.mxu0 0.0
        %925 = vmatprep.subr.mxu0 0.0
        %926 = vmatpush2.xpose.msra.mxu0 0.0
        %927 = vmatprep.subr.mxu0 0.0
        %928 = vmatpush2.xpose.msra.mxu0 0.0
        %929 = vmatprep.subr.mxu0 0.0
        %930 = vmatpush2.xpose.msra.mxu0 0.0
        %931 = vmatprep.subr.mxu0 0.0
        %932 = vmatpush2.xpose.msra.mxu0 0.0
        %933 = vmatprep.subr.mxu0 0.0
        %934 = vmatpush2.xpose.msra.mxu0 0.0
        %935 = vmatprep.subr.mxu0 0.0
        %936 = vmatpush2.xpose.msra.mxu0 0.0
        %937 = vmatprep.subr.mxu0 0.0
        %938 = vmatpush2.xpose.msra.mxu0 0.0
        %939 = vmatprep.subr.mxu0 0.0
        %940 = vmatpush2.xpose.msra.mxu0 0.0
        %941 = vmatprep.subr.mxu0 0.0
        %942 = vmatpush2.xpose.msra.mxu0 0.0
        %943 = vmatprep.mubr.f32.mxu0 0.0
        %944 = vmatmul.mubr.f32.gmra.mxu0 %v875
        %v945 = vpop.f32.mrf.mxu0
        %v946 = vadd.f32 0.0, %v945
        %v947 = vpop.f32.mrf.mxu0
        %948 = vdwg.mxu0
        %v949 = vsel %vm440, %v946, -1e+30
        %v950 = vsel %vm474, %v949, -inf
        %951 = vmax.xlane.f32.xlu0 %v950
        %v952 = vpop.xlane.xlu0 %951
        %v953 = vsub.f32 %v949, %v952
        %v954 = vmul.f32 %v953, 1.442695
        %v955 = vpow.pop %v954
        %v956 = vsel %vm474, %v955, 0.0
        %957 = vadd.xlane.f32.xlu0 %v956
        %v958 = vpop.xlane.xlu0 %957
        %959 = vrot.lane.b32.xlu0 %v431, 48
        %v960 = vpop.permute.xlu0 %959
        %v963 = vsel %vm474, %v955, 0
        %965 = vmatprep.subr.mxu0 0.0
        %966 = vmatpush1.msra.mxu0 0.0
        %967 = vmatprep.subr.mxu0 0.0
        %968 = vmatpush1.msra.mxu0 0.0
        %969 = vmatprep.subr.mxu0 0.0
        %970 = vmatpush1.msra.mxu0 0.0
        %971 = vmatprep.subr.mxu0 0.0
        %972 = vmatpush1.msra.mxu0 0.0
        %973 = vmatprep.subr.mxu0 0.0
        %974 = vmatpush1.msra.mxu0 0.0
        %975 = vmatprep.subr.mxu0 0.0
        %976 = vmatpush1.msra.mxu0 0.0
        %977 = vmatprep.subr.mxu0 0.0
        %978 = vmatpush1.msra.mxu0 0.0
        %979 = vmatprep.subr.mxu0 0.0
        %980 = vmatpush1.msra.mxu0 0.0
        %981 = vmatprep.subr.mxu0 0.0
        %982 = vmatpush1.msra.mxu0 0.0
        %983 = vmatprep.subr.mxu0 0.0
        %984 = vmatpush1.msra.mxu0 0.0
        %985 = vmatprep.subr.mxu0 0.0
        %986 = vmatpush1.msra.mxu0 0.0
        %987 = vmatprep.subr.mxu0 0.0
        %988 = vmatpush1.msra.mxu0 0.0
        %989 = vmatprep.subr.mxu0 0.0
        %990 = vmatpush1.msra.mxu0 0.0
        %991 = vmatprep.subr.mxu0 0.0
        %992 = vmatpush1.msra.mxu0 0.0
        %993 = vmatprep.subr.mxu0 0.0
        %994 = vmatpush1.msra.mxu0 0.0
        %995 = vmatprep.subr.mxu0 0.0
        %996 = vmatpush1.msra.mxu0 %v960
        %997 = vmatprep.subr.mxu0 0.0
        %998 = vmatpush2.msra.mxu0 0.0
        %999 = vmatprep.subr.mxu0 0.0
        %1000 = vmatpush2.msra.mxu0 0.0
        %1001 = vmatprep.subr.mxu0 0.0
        %1002 = vmatpush2.msra.mxu0 0.0
        %1003 = vmatprep.subr.mxu0 0.0
        %1004 = vmatpush2.msra.mxu0 0.0
        %1005 = vmatprep.subr.mxu0 0.0
        %1006 = vmatpush2.msra.mxu0 0.0
        %1007 = vmatprep.subr.mxu0 0.0
        %1008 = vmatpush2.msra.mxu0 0.0
        %1009 = vmatprep.subr.mxu0 0.0
        %1010 = vmatpush2.msra.mxu0 0.0
        %1011 = vmatprep.subr.mxu0 0.0
        %1012 = vmatpush2.msra.mxu0 0.0
        %1013 = vmatprep.subr.mxu0 0.0
        %1014 = vmatpush2.msra.mxu0 0.0
        %1015 = vmatprep.subr.mxu0 0.0
        %1016 = vmatpush2.msra.mxu0 0.0
        %1017 = vmatprep.subr.mxu0 0.0
        %1018 = vmatpush2.msra.mxu0 0.0
        %1019 = vmatprep.subr.mxu0 0.0
        %1020 = vmatpush2.msra.mxu0 0.0
        %1021 = vmatprep.subr.mxu0 0.0
        %1022 = vmatpush2.msra.mxu0 0.0
        %1023 = vmatprep.subr.mxu0 0.0
        %1024 = vmatpush2.msra.mxu0 0.0
        %1025 = vmatprep.subr.mxu0 0.0
        %1026 = vmatpush2.msra.mxu0 0.0
        %1027 = vmatprep.subr.mxu0 0.0
        %1028 = vmatpush2.msra.mxu0 0.0
        %1029 = vmatprep.mubr.f32.mxu0 0.0
        %1030 = vmatmul.mubr.f32.gmra.mxu0 %v963
        %v1031 = vpop.f32.mrf.mxu0
        %v1032 = vadd.f32 0.0, %v1031
        %v1033 = vpop.f32.mrf.mxu0
        %1034 = vdwg.mxu0
        %v1035 = vrcp.pop %v958
        %v1036 = vmul.f32 %v1032, %v1035
        %1038 = vrot.lane.b32.xlu0 %v1036, 16
        %v1039 = vpop.permute.xlu0 %1038
        %vm1041 = vcmask 195712
        %1042 = vst.msk [vmem:[#allocation2] sm:$0xff] %vm1041, %v1039
        %v1043 = vsel %vm448, %v457, %v842
        %1044 = vrot.lane.b32.xlu0 %v434, 24
        %v1045 = vpop.permute.xlu0 %1044
        %v1047 = vmul.f32 %v431, %v1045
        %v1048 = vmul.f32 %v1043, %v435
        %1050 = vrot.lane.b32.xlu0 %v1048, 24
        %v1051 = vpop.permute.xlu0 %1050
        %v1053 = vadd.f32 %v1047, %v1051
        %1054 = vrot.lane.b32.xlu0 %v431, 68
        %v1055 = vpop.permute.xlu0 %1054
        %v1057 = vsel %vm448, %v1055, %v856
        %1058 = vrot.lane.b32.xlu0 %v434, 56
        %v1059 = vpop.permute.xlu0 %1058
        %v1061 = vmul.f32 %v431, %v1059
        %v1062 = vmul.f32 %v1057, %v435
        %1064 = vrot.lane.b32.xlu0 %v1062, 56
        %v1065 = vpop.permute.xlu0 %1064
        %v1067 = vadd.f32 %v1061, %v1065
        %1069 = vrot.lane.b32.xlu0 %v1053, 104
        %v1070 = vpop.permute.xlu0 %1069
        %1072 = vrot.lane.b32.xlu0 %v1067, 72
        %v1073 = vpop.permute.xlu0 %1072
        %v1074 = vsel %vm474, %v1070, 0
        %v1076 = vsel %vm474, %v1073, 0
        %1078 = vmatprep.subr.mxu0 0.0
        %1079 = vmatpush1.xpose.msra.mxu0 0.0
        %1080 = vmatprep.subr.mxu0 0.0
        %1081 = vmatpush1.xpose.msra.mxu0 0.0
        %1082 = vmatprep.subr.mxu0 0.0
        %1083 = vmatpush1.xpose.msra.mxu0 0.0
        %1084 = vmatprep.subr.mxu0 0.0
        %1085 = vmatpush1.xpose.msra.mxu0 0.0
        %1086 = vmatprep.subr.mxu0 0.0
        %1087 = vmatpush1.xpose.msra.mxu0 0.0
        %1088 = vmatprep.subr.mxu0 0.0
        %1089 = vmatpush1.xpose.msra.mxu0 0.0
        %1090 = vmatprep.subr.mxu0 0.0
        %1091 = vmatpush1.xpose.msra.mxu0 0.0
        %1092 = vmatprep.subr.mxu0 0.0
        %1093 = vmatpush1.xpose.msra.mxu0 0.0
        %1094 = vmatprep.subr.mxu0 0.0
        %1095 = vmatpush1.xpose.msra.mxu0 0.0
        %1096 = vmatprep.subr.mxu0 0.0
        %1097 = vmatpush1.xpose.msra.mxu0 0.0
        %1098 = vmatprep.subr.mxu0 0.0
        %1099 = vmatpush1.xpose.msra.mxu0 0.0
        %1100 = vmatprep.subr.mxu0 0.0
        %1101 = vmatpush1.xpose.msra.mxu0 0.0
        %1102 = vmatprep.subr.mxu0 0.0
        %1103 = vmatpush1.xpose.msra.mxu0 0.0
        %1104 = vmatprep.subr.mxu0 0.0
        %1105 = vmatpush1.xpose.msra.mxu0 0.0
        %1106 = vmatprep.subr.mxu0 0.0
        %1107 = vmatpush1.xpose.msra.mxu0 0.0
        %1108 = vmatprep.subr.mxu0 0.0
        %1109 = vmatpush1.xpose.msra.mxu0 %v1076
        %1110 = vmatprep.subr.mxu0 0.0
        %1111 = vmatpush2.xpose.msra.mxu0 0.0
        %1112 = vmatprep.subr.mxu0 0.0
        %1113 = vmatpush2.xpose.msra.mxu0 0.0
        %1114 = vmatprep.subr.mxu0 0.0
        %1115 = vmatpush2.xpose.msra.mxu0 0.0
        %1116 = vmatprep.subr.mxu0 0.0
        %1117 = vmatpush2.xpose.msra.mxu0 0.0
        %1118 = vmatprep.subr.mxu0 0.0
        %1119 = vmatpush2.xpose.msra.mxu0 0.0
        %1120 = vmatprep.subr.mxu0 0.0
        %1121 = vmatpush2.xpose.msra.mxu0 0.0
        %1122 = vmatprep.subr.mxu0 0.0
        %1123 = vmatpush2.xpose.msra.mxu0 0.0
        %1124 = vmatprep.subr.mxu0 0.0
        %1125 = vmatpush2.xpose.msra.mxu0 0.0
        %1126 = vmatprep.subr.mxu0 0.0
        %1127 = vmatpush2.xpose.msra.mxu0 0.0
        %1128 = vmatprep.subr.mxu0 0.0
        %1129 = vmatpush2.xpose.msra.mxu0 0.0
        %1130 = vmatprep.subr.mxu0 0.0
        %1131 = vmatpush2.xpose.msra.mxu0 0.0
        %1132 = vmatprep.subr.mxu0 0.0
        %1133 = vmatpush2.xpose.msra.mxu0 0.0
        %1134 = vmatprep.subr.mxu0 0.0
        %1135 = vmatpush2.xpose.msra.mxu0 0.0
        %1136 = vmatprep.subr.mxu0 0.0
        %1137 = vmatpush2.xpose.msra.mxu0 0.0
        %1138 = vmatprep.subr.mxu0 0.0
        %1139 = vmatpush2.xpose.msra.mxu0 0.0
        %1140 = vmatprep.subr.mxu0 0.0
        %1141 = vmatpush2.xpose.msra.mxu0 0.0
        %1142 = vmatprep.mubr.f32.mxu0 0.0
        %1143 = vmatmul.mubr.f32.gmra.mxu0 %v1074
        %v1144 = vpop.f32.mrf.mxu0
        %v1145 = vadd.f32 0.0, %v1144
        %v1146 = vpop.f32.mrf.mxu0
        %1147 = vdwg.mxu0
        %v1148 = vsel %vm440, %v1145, -1e+30
        %v1149 = vsel %vm474, %v1148, -inf
        %1150 = vmax.xlane.f32.xlu0 %v1149
        %v1151 = vpop.xlane.xlu0 %1150
        %v1152 = vsub.f32 %v1148, %v1151
        %v1153 = vmul.f32 %v1152, 1.442695
        %v1154 = vpow.pop %v1153
        %v1155 = vsel %vm474, %v1154, 0.0
        %1156 = vadd.xlane.f32.xlu0 %v1155
        %v1157 = vpop.xlane.xlu0 %1156
        %1158 = vrot.lane.b32.xlu0 %v431, 40
        %v1159 = vpop.permute.xlu0 %1158
        %v1162 = vsel %vm474, %v1154, 0
        %1164 = vmatprep.subr.mxu0 0.0
        %1165 = vmatpush1.msra.mxu0 0.0
        %1166 = vmatprep.subr.mxu0 0.0
        %1167 = vmatpush1.msra.mxu0 0.0
        %1168 = vmatprep.subr.mxu0 0.0
        %1169 = vmatpush1.msra.mxu0 0.0
        %1170 = vmatprep.subr.mxu0 0.0
        %1171 = vmatpush1.msra.mxu0 0.0
        %1172 = vmatprep.subr.mxu0 0.0
        %1173 = vmatpush1.msra.mxu0 0.0
        %1174 = vmatprep.subr.mxu0 0.0
        %1175 = vmatpush1.msra.mxu0 0.0
        %1176 = vmatprep.subr.mxu0 0.0
        %1177 = vmatpush1.msra.mxu0 0.0
        %1178 = vmatprep.subr.mxu0 0.0
        %1179 = vmatpush1.msra.mxu0 0.0
        %1180 = vmatprep.subr.mxu0 0.0
        %1181 = vmatpush1.msra.mxu0 0.0
        %1182 = vmatprep.subr.mxu0 0.0
        %1183 = vmatpush1.msra.mxu0 0.0
        %1184 = vmatprep.subr.mxu0 0.0
        %1185 = vmatpush1.msra.mxu0 0.0
        %1186 = vmatprep.subr.mxu0 0.0
        %1187 = vmatpush1.msra.mxu0 0.0
        %1188 = vmatprep.subr.mxu0 0.0
        %1189 = vmatpush1.msra.mxu0 0.0
        %1190 = vmatprep.subr.mxu0 0.0
        %1191 = vmatpush1.msra.mxu0 0.0
        %1192 = vmatprep.subr.mxu0 0.0
        %1193 = vmatpush1.msra.mxu0 0.0
        %1194 = vmatprep.subr.mxu0 0.0
        %1195 = vmatpush1.msra.mxu0 %v1159
        %1196 = vmatprep.subr.mxu0 0.0
        %1197 = vmatpush2.msra.mxu0 0.0
        %1198 = vmatprep.subr.mxu0 0.0
        %1199 = vmatpush2.msra.mxu0 0.0
        %1200 = vmatprep.subr.mxu0 0.0
        %1201 = vmatpush2.msra.mxu0 0.0
        %1202 = vmatprep.subr.mxu0 0.0
        %1203 = vmatpush2.msra.mxu0 0.0
        %1204 = vmatprep.subr.mxu0 0.0
        %1205 = vmatpush2.msra.mxu0 0.0
        %1206 = vmatprep.subr.mxu0 0.0
        %1207 = vmatpush2.msra.mxu0 0.0
        %1208 = vmatprep.subr.mxu0 0.0
        %1209 = vmatpush2.msra.mxu0 0.0
        %1210 = vmatprep.subr.mxu0 0.0
        %1211 = vmatpush2.msra.mxu0 0.0
        %1212 = vmatprep.subr.mxu0 0.0
        %1213 = vmatpush2.msra.mxu0 0.0
        %1214 = vmatprep.subr.mxu0 0.0
        %1215 = vmatpush2.msra.mxu0 0.0
        %1216 = vmatprep.subr.mxu0 0.0
        %1217 = vmatpush2.msra.mxu0 0.0
        %1218 = vmatprep.subr.mxu0 0.0
        %1219 = vmatpush2.msra.mxu0 0.0
        %1220 = vmatprep.subr.mxu0 0.0
        %1221 = vmatpush2.msra.mxu0 0.0
        %1222 = vmatprep.subr.mxu0 0.0
        %1223 = vmatpush2.msra.mxu0 0.0
        %1224 = vmatprep.subr.mxu0 0.0
        %1225 = vmatpush2.msra.mxu0 0.0
        %1226 = vmatprep.subr.mxu0 0.0
        %1227 = vmatpush2.msra.mxu0 0.0
        %1228 = vmatprep.mubr.f32.mxu0 0.0
        %1229 = vmatmul.mubr.f32.gmra.mxu0 %v1162
        %v1230 = vpop.f32.mrf.mxu0
        %v1231 = vadd.f32 0.0, %v1230
        %v1232 = vpop.f32.mrf.mxu0
        %1233 = vdwg.mxu0
        %v1234 = vrcp.pop %v1157
        %v1235 = vmul.f32 %v1231, %v1234
        %1237 = vrot.lane.b32.xlu0 %v1235, 24
        %v1238 = vpop.permute.xlu0 %1237
        %vm1240 = vcmask 261312
        %1241 = vst.msk [vmem:[#allocation2] sm:$0xff] %vm1240, %v1238
        %v1242 = vld [vmem:[#allocation2] sm:$0xff]
        %v1243 = vld [vmem:[#allocation11] sm:$0xff]
        %v1244 = vld [vmem:[#allocation11 + $0x8] sm:$0xff]
        %v1245 = vld [vmem:[#allocation11 + $0x10] sm:$0xff]
        %v1246 = vld [vmem:[#allocation11 + $0x18] sm:$0xff]
        %v1247 = vld [vmem:[%s6] sm:$0x1]
        %v1249 = vlaneseq
        %v1250 = vshrl.u32 %v1249, 7
        %v1251 = vsub.s32 0, %v1250
        %v1252 = vrot.slane %v1247, %v1251
        %v1255 = vsel %vm360, %v1242, 0
        %1257 = vmatprep.subr.mxu0 0.0
        %1258 = vmatpush1.msra.mxu0 0.0
        %1259 = vmatprep.subr.mxu0 0.0
        %1260 = vmatpush1.msra.mxu0 0.0
        %1261 = vmatprep.subr.mxu0 0.0
        %1262 = vmatpush1.msra.mxu0 0.0
        %1263 = vmatprep.subr.mxu0 0.0
        %1264 = vmatpush1.msra.mxu0 0.0
        %1265 = vmatprep.subr.mxu0 0.0
        %1266 = vmatpush1.msra.mxu0 0.0
        %1267 = vmatprep.subr.mxu0 0.0
        %1268 = vmatpush1.msra.mxu0 0.0
        %1269 = vmatprep.subr.mxu0 0.0
        %1270 = vmatpush1.msra.mxu0 0.0
        %1271 = vmatprep.subr.mxu0 0.0
        %1272 = vmatpush1.msra.mxu0 0.0
        %1273 = vmatprep.subr.mxu0 0.0
        %1274 = vmatpush1.msra.mxu0 0.0
        %1275 = vmatprep.subr.mxu0 0.0
        %1276 = vmatpush1.msra.mxu0 0.0
        %1277 = vmatprep.subr.mxu0 0.0
        %1278 = vmatpush1.msra.mxu0 0.0
        %1279 = vmatprep.subr.mxu0 0.0
        %1280 = vmatpush1.msra.mxu0 0.0
        %1281 = vmatprep.subr.mxu0 0.0
        %1282 = vmatpush1.msra.mxu0 %v1246
        %1283 = vmatprep.subr.mxu0 0.0
        %1284 = vmatpush1.msra.mxu0 %v1245
        %1285 = vmatprep.subr.mxu0 0.0
        %1286 = vmatpush1.msra.mxu0 %v1244
        %1287 = vmatprep.subr.mxu0 0.0
        %1288 = vmatpush1.msra.mxu0 %v1243
        %1289 = vmatprep.subr.mxu0 0.0
        %1290 = vmatpush2.msra.mxu0 0.0
        %1291 = vmatprep.subr.mxu0 0.0
        %1292 = vmatpush2.msra.mxu0 0.0
        %1293 = vmatprep.subr.mxu0 0.0
        %1294 = vmatpush2.msra.mxu0 0.0
        %1295 = vmatprep.subr.mxu0 0.0
        %1296 = vmatpush2.msra.mxu0 0.0
        %1297 = vmatprep.subr.mxu0 0.0
        %1298 = vmatpush2.msra.mxu0 0.0
        %1299 = vmatprep.subr.mxu0 0.0
        %1300 = vmatpush2.msra.mxu0 0.0
        %1301 = vmatprep.subr.mxu0 0.0
        %1302 = vmatpush2.msra.mxu0 0.0
        %1303 = vmatprep.subr.mxu0 0.0
        %1304 = vmatpush2.msra.mxu0 0.0
        %1305 = vmatprep.subr.mxu0 0.0
        %1306 = vmatpush2.msra.mxu0 0.0
        %1307 = vmatprep.subr.mxu0 0.0
        %1308 = vmatpush2.msra.mxu0 0.0
        %1309 = vmatprep.subr.mxu0 0.0
        %1310 = vmatpush2.msra.mxu0 0.0
        %1311 = vmatprep.subr.mxu0 0.0
        %1312 = vmatpush2.msra.mxu0 0.0
        %1313 = vmatprep.subr.mxu0 0.0
        %1314 = vmatpush2.msra.mxu0 0.0
        %1315 = vmatprep.subr.mxu0 0.0
        %1316 = vmatpush2.msra.mxu0 0.0
        %1317 = vmatprep.subr.mxu0 0.0
        %1318 = vmatpush2.msra.mxu0 0.0
        %1319 = vmatprep.subr.mxu0 0.0
        %1320 = vmatpush2.msra.mxu0 0.0
        %1321 = vmatprep.mubr.f32.mxu0 0.0
        %1322 = vmatmul.mubr.f32.gmra.mxu0 %v1255
        %v1323 = vpop.f32.mrf.mxu0
        %v1324 = vadd.f32 %v1252, %v1323
        %v1325 = vpop.f32.mrf.mxu0
        %1326 = vdwg.mxu0
        %1327 = vst.msk [vmem:[%s347] sm:$0xff] %vm360, %v1324
        %s1328 = sand.u32 %s186, 1
        %s1329 = scalar_lea.sflag [#allocation5], %s1328
        %s1330 = sand.u32 %s186, 1
        %s1331 = smul.addr %s1330, 8
        %s1332 = scalar_lea.vmem [#allocation12], %s1331
        // Predicated region
        $region69: #{tpu_custom_call.1} parent=47 // pred_check
          %p1333 = pneg %p196
        $region70: #{tpu_custom_call.1} parent=47 // pred_check_branch
          %1335 = sbr.rel (%p1333) target = $region72
        $region71: #{tpu_custom_call.1} parent=47 // pred_region
          %s1337 = ssub.s32 128, 128
          %1338 = vsyncadd %s1329, %s1337
          %s1339 = smul.addr %s26, 128
          %s1340 = scalar_lea.hbm %s7, %s1339
          %s1342 = sshll.u32 %s1332, 4
          %s1343 = int_to_ptr.vmem [resolvable:$true] %s1342
          %1345 = dma.vmem_to_hbm [thread:$0]  %s1343, 128, %s1340, %s1329
        $region72: #{tpu_custom_call.1} parent=47 // pred_fallthru
          _
      $region48: #{tpu_custom_call.1} parent=5 // pred_fallthru
        _
      %p1346 = scmp.le.s32.totalorder 2, %s21
      // Predicated region
      $region73: #{tpu_custom_call.1} parent=5 // pred_check
        %p1347 = pneg %p1346
      $region74: #{tpu_custom_call.1} parent=5 // pred_check_branch
        %1349 = sbr.rel (%p1347) target = $region76
      $region75: #{tpu_custom_call.1} parent=5 // pred_region
        %s1350 = ssub.s32 %s21, 2
        // Predicated region
        $region77: #{tpu_custom_call.1} parent=75 // pred_check
          %p1351 = pneg %p202
        $region78: #{tpu_custom_call.1} parent=75 // pred_check_branch
          %1353 = sbr.rel (%p1351) target = $region80
        $region79: #{tpu_custom_call.1} parent=75 // pred_region
          %s1354 = sand.u32 %s187, 1
          %s1355 = scalar_lea.sflag [#allocation5], %s1354
          %s1356 = sand.u32 %s187, 1
          %s1357 = smul.addr %s1356, 8
          %s1358 = scalar_lea.vmem [#allocation12], %s1357
          %1359 = dma.done %s1355, 128
        $region80: #{tpu_custom_call.1} parent=75 // pred_fallthru
          _
      $region76: #{tpu_custom_call.1} parent=5 // pred_fallthru
        _
    $region6: #{tpu_custom_call.1} parent=1 // loop_footer
      %s25 = sadd.s32 1, %s21
    $region7: #{tpu_custom_call.1} parent=1 // loop_footer_branch
      %20 = sbr.rel target = $region3
    $region8: #{tpu_custom_call.1} parent=1 // loop_exit
      _
    %1360 = vsyncpa [#allocation4], 1
    %s1361 = scalar_lea.sflag [#allocation4], 1
    %1362 = vsyncpa %s1361, 1
    %1363 = vsyncpa [#allocation7], 1
    %1364 = vsyncpa [#allocation10], 1
    %1365 = vsyncpa [#allocation5], 1
    %s1366 = scalar_lea.sflag [#allocation5], 1
    %1367 = vsyncpa %s1366, 1

</llo_original>
